<compile_context>
chip_gen: v7x
topology: tpu7x:2x2x1
jax: 0.10.0
libtpu: 0.0.40
codegen_flags: <defaults>
</compile_context>

<pallas_src>
import functools

import jax
import jax.numpy as jnp
import numpy as np
from jax import lax
from jax.experimental import pallas as pl
from jax.experimental.pallas import tpu as pltpu


def _custom_conv_kernel(*refs, C, OC, KH, KW, TH, W, ph, pw):
    """One (batch, row-tile) grid step.

    refs (ph > 0): body (C, TH, W), halo (C, 2*ph, W), w (OC*C*KH*KW,) SMEM,
                   bias (OC,) SMEM, out (OC, TH, W), xasm (C, TH+KH-1, W) f32.
    refs (ph == 0): body, w, bias, out, xasm.
    """
    if ph > 0:
        body_ref, halo_ref, w_ref, b_ref, o_ref, xasm = refs
    else:
        body_ref, w_ref, b_ref, o_ref, xasm = refs

    f32 = jnp.float32
    THH = TH + KH - 1

    # Assemble the haloed row block for this tile (cast to f32 once).
    xasm[:, ph:ph + TH, :] = body_ref[...].astype(f32)
    if ph > 0:
        xasm[:, :ph, :] = halo_ref[:, :ph, :].astype(f32)
        xasm[:, ph + TH:, :] = halo_ref[:, ph:, :].astype(f32)

    # Hoisted lane-validity masks for the width shifts (depend only on kw).
    masks = {}
    if pw > 0:
        lane = lax.broadcasted_iota(jnp.int32, (THH, W), 1)
        for kw in range(KW):
            s = kw - pw
            if s > 0:
                masks[s] = lane < (W - s)
            elif s < 0:
                masks[s] = lane >= (-s)

    # Register accumulators, initialised with the bias; single store at the end.
    accs = [jnp.full((TH, W), b_ref[oc], dtype=f32) for oc in range(OC)]

    for ic in range(C):
        xi = xasm[ic]                                    # (THH, W) f32
        for kw in range(KW):
            s = kw - pw                                  # width offset of this tap
            if s == 0:
                xs = xi
            else:
                # xs[:, w] = xi[:, w + s] for valid w, 0 outside the image.
                xs = pltpu.roll(xi, shift=(-s) % W, axis=1)
                xs = jnp.where(masks[s], xs, 0.0)
            for kh in range(KH):
                tap = xs[kh:kh + TH, :]                  # (TH, W) row window
                for oc in range(OC):
                    wv = w_ref[((oc * C + ic) * KH + kh) * KW + kw]
                    accs[oc] = accs[oc] + tap * wv       # scalar-broadcast FMA (VPU)

    for oc in range(OC):                                 # lane-dense stores
        o_ref[oc, :, :] = accs[oc].astype(o_ref.dtype)


def custom_conv(x, weight, bias, *, row_tile=None):
    """Forward pass of CustomConv (NCHW in, NCHW out).

    __init__:  affine_scale = amax(|W|, (1,2,3));  W <- W / (affine_scale + 1e-16)
    forward :  y = conv2d(x * affine_scale[None,:,None,None], W, bias),
               stride 1, 'same' padding.
    Both scales are folded (in f32) into one effective weight before the
    kernel:  conv(x * a, W * s1) == conv(x, W * s1[oc] * a[ic]).
    """
    OC, IC, KH, KW = weight.shape
    N, C, H, W = x.shape
    assert C == IC and C == OC, "CustomConv's input scaling requires C == IC == OC"
    assert KH % 2 == 1 and KW % 2 == 1, "'same' padding here assumes odd kernels"
    ph, pw = KH // 2, KW // 2

    # ---- parameter folding (kept in f32; bf16 folding drifts vs reference) ---
    w32 = weight.astype(jnp.float32)
    affine_scale = jnp.max(jnp.abs(w32), axis=(1, 2, 3))               # (OC,)
    scale1 = 1.0 / (affine_scale + 1e-16)
    w_eff = w32 * scale1[:, None, None, None] * affine_scale[None, :, None, None]
    w_flat = w_eff.reshape(-1)                                         # SMEM table
    b_vec = bias.astype(jnp.float32).reshape(OC)

    # ---- row-tile selection under a per-generation VMEM budget ---------------
    try:
        vmem_cap = int(pltpu.get_tpu_info().vmem_capacity_bytes)
    except Exception:
        vmem_cap = 64 * 2 ** 20            # conservative (v7x per-core VMEM)
    budget = min(vmem_cap // 4, 32 * 2 ** 20)

    x_isz = jnp.dtype(x.dtype).itemsize

    def tile_bytes(th):
        thh = th + KH - 1
        return (2 * C * th * W * x_isz               # double-buffered body blocks
                + 2 * C * 2 * ph * W * x_isz         # double-buffered halo blocks
                + 2 * OC * th * W * x_isz            # double-buffered output blocks
                + C * thh * W * 4                    # f32 assembly scratch
                + (2 * thh + (OC + 1) * th) * W * 4)  # in-kernel f32 temporaries

    if row_tile is None:
        cands = [t for t in range(1, H + 1)
                 if H % t == 0 and (t == H or t % 8 == 0) and t >= ph]
        fitting = [t for t in cands if tile_bytes(t) <= budget]
        row_tile = max(fitting) if fitting else min(cands)
    TH = int(row_tile)
    assert H % TH == 0 and (TH == H or TH % 8 == 0), "invalid row_tile"
    assert TH >= ph, "row_tile must be at least the halo size"
    HT = H // TH
    THH = TH + KH - 1
    vmem_limit = int(min(max(2 * tile_bytes(TH), 16 * 2 ** 20), vmem_cap // 2))

    # ---- operands & specs -----------------------------------------------------
    operands = [x]
    in_specs = [pl.BlockSpec((None, C, TH, W), lambda n, t: (n, 0, t, 0))]
    if ph > 0:
        # Tiny halo slab: for tile t, image rows [t*TH-ph, t*TH) and
        # [(t+1)*TH, (t+1)*TH+ph), with zero rows at the image edges.
        xr = x.reshape(N, C, HT, TH, W)
        zrow = jnp.zeros((N, C, 1, ph, W), x.dtype)
        top = jnp.concatenate([zrow, xr[:, :, :HT - 1, TH - ph:, :]], axis=2)
        bot = jnp.concatenate([xr[:, :, 1:, :ph, :], zrow], axis=2)
        halo = jnp.concatenate([top, bot], axis=3)            # (N, C, HT, 2ph, W)
        halo = jnp.transpose(halo, (0, 2, 1, 3, 4))           # (N, HT, C, 2ph, W)
        operands.append(halo)
        in_specs.append(
            pl.BlockSpec((None, None, C, 2 * ph, W), lambda n, t: (n, t, 0, 0, 0)))
    operands += [w_flat, b_vec]
    in_specs += [pl.BlockSpec(memory_space=pltpu.MemorySpace.SMEM),
                 pl.BlockSpec(memory_space=pltpu.MemorySpace.SMEM)]

    kernel = functools.partial(_custom_conv_kernel, C=C, OC=OC, KH=KH, KW=KW,
                               TH=TH, W=W, ph=ph, pw=pw)

    return pl.pallas_call(
        kernel,
        grid=(N, HT),
        in_specs=in_specs,
        out_specs=pl.BlockSpec((None, OC, TH, W), lambda n, t: (n, 0, t, 0)),
        out_shape=jax.ShapeDtypeStruct((N, OC, H, W), x.dtype),
        scratch_shapes=[pltpu.VMEM((C, THH, W), jnp.float32)],
        compiler_params=pltpu.CompilerParams(
            dimension_semantics=("parallel", "parallel"),
            vmem_limit_bytes=vmem_limit),
    )(*operands)


def _reference(x_nchw, weight, bias):
    """Pure-JAX reference of CustomConv.forward (NCHW)."""
    affine_scale = jnp.max(jnp.abs(weight), axis=(1, 2, 3))
    scale1 = 1.0 / (affine_scale + 1e-16)
    w_scaled = weight * scale1[:, None, None, None]
    xs = x_nchw * affine_scale.reshape(1, -1, 1, 1)
    KH, KW = weight.shape[2], weight.shape[3]
    out = lax.conv_general_dilated(
        xs, w_scaled,
        window_strides=(1, 1),
        padding=((KH // 2, KH // 2), (KW // 2, KW // 2)),
        dimension_numbers=("NCHW", "OIHW", "NCHW"),
    )
    return out + bias.reshape(1, -1, 1, 1)


if __name__ == "__main__":
    # Small deterministic setup: Conv2d(4, 4, kernel_size=3, padding=1, bias=True)
    N, C, H, W = 2, 4, 16, 16
    OC, KH, KW = 4, 3, 3

    key = jax.random.PRNGKey(0)
    kx, kwt, kb, kwt5, kb5 = jax.random.split(key, 5)
    x = jax.random.normal(kx, (N, C, H, W), dtype=jnp.float32)
    weight = jax.random.normal(kwt, (OC, C, KH, KW), dtype=jnp.float32) * 0.1
    bias = jax.random.normal(kb, (OC,), dtype=jnp.float32) * 0.01

    ref = jax.block_until_ready(_reference(x, weight, bias))

    # (a) two row tiles per image -> exercises the top/bottom halo rows.
    out = jax.block_until_ready(custom_conv(x, weight, bias, row_tile=8))
    np.testing.assert_allclose(np.asarray(out), np.asarray(ref), rtol=2e-5, atol=2e-5)

    # (b) auto row tile (single tile per image -> all-zero halo slab).
    out1 = jax.block_until_ready(custom_conv(x, weight, bias))
    np.testing.assert_allclose(np.asarray(out1), np.asarray(ref), rtol=2e-5, atol=2e-5)

    # (c) 5x5 taps -> wider lane shifts and two halo rows per edge.
    weight5 = jax.random.normal(kwt5, (OC, C, 5, 5), dtype=jnp.float32) * 0.05
    bias5 = jax.random.normal(kb5, (OC,), dtype=jnp.float32) * 0.01
    out5 = jax.block_until_ready(custom_conv(x, weight5, bias5, row_tile=8))
    ref5 = jax.block_until_ready(_reference(x, weight5, bias5))
    np.testing.assert_allclose(np.asarray(out5), np.asarray(ref5), rtol=2e-5, atol=2e-5)

    print("KERNEL_OK")
</pallas_src>

<mosaic_0001>
module attributes {stable_mosaic.version = 11 : i64} {
  func.func @_custom_conv_kernel(%arg0: i32, %arg1: i32, %arg2: memref<1x4x8x16xf32, #tpu.memory_space<vmem>>, %arg3: memref<1x1x4x2x16xf32, #tpu.memory_space<vmem>>, %arg4: memref<144xf32, #tpu.memory_space<smem>>, %arg5: memref<4xf32, #tpu.memory_space<smem>>, %arg6: memref<1x4x8x16xf32, #tpu.memory_space<vmem>>, %arg7: memref<4x10x16xf32, #tpu.memory_space<vmem>>) attributes {dimension_semantics = [#tpu.dimension_semantics<parallel>, #tpu.dimension_semantics<parallel>], iteration_bounds = array<i64: 2, 2>, scalar_prefetch = 0 : i64, scratch_operands = 1 : i64, tpu.core_type = #tpu.core_type<tc>, window_params = [{transform_indices = @transform_0, window_bounds = array<i64: 1, 4, 8, 16>}, {transform_indices = @transform_1, window_bounds = array<i64: 1, 1, 4, 2, 16>}, {transform_indices = @transform_2, window_bounds = array<i64: 144>}, {transform_indices = @transform_3, window_bounds = array<i64: 4>}, {transform_indices = @transform_4, window_bounds = array<i64: 1, 4, 8, 16>}]} {
    %c0 = arith.constant 0 : index
    %c0_0 = arith.constant 0 : index
    %c0_1 = arith.constant 0 : index
    %c0_2 = arith.constant 0 : index
    %0 = vector.load %arg2[%c0, %c0_0, %c0_1, %c0_2] : memref<1x4x8x16xf32, #tpu.memory_space<vmem>>, vector<1x4x8x16xf32>
    %1 = vector.shape_cast %0 : vector<1x4x8x16xf32> to vector<4x8x16xf32>
    %c0_3 = arith.constant 0 : index
    %c1 = arith.constant 1 : index
    %c0_4 = arith.constant 0 : index
    %2 = vector.load %arg7[%c0_3, %c1, %c0_4] : memref<4x10x16xf32, #tpu.memory_space<vmem>>, vector<4x8x16xf32>
    tpu.vector_store %arg7[%c0_3, %c1, %c0_4], %1 {strides = array<i32>} : memref<4x10x16xf32, #tpu.memory_space<vmem>>, vector<4x8x16xf32>,
    %c0_5 = arith.constant 0 : index
    %c0_6 = arith.constant 0 : index
    %c0_7 = arith.constant 0 : index
    %c0_8 = arith.constant 0 : index
    %c0_9 = arith.constant 0 : index
    %3 = vector.load %arg3[%c0_5, %c0_6, %c0_7, %c0_8, %c0_9] : memref<1x1x4x2x16xf32, #tpu.memory_space<vmem>>, vector<1x1x4x1x16xf32>
    %4 = vector.shape_cast %3 : vector<1x1x4x1x16xf32> to vector<4x1x16xf32>
    %c0_10 = arith.constant 0 : index
    %c0_11 = arith.constant 0 : index
    %c0_12 = arith.constant 0 : index
    %5 = vector.load %arg7[%c0_10, %c0_11, %c0_12] : memref<4x10x16xf32, #tpu.memory_space<vmem>>, vector<4x1x16xf32>
    tpu.vector_store %arg7[%c0_10, %c0_11, %c0_12], %4 {strides = array<i32>} : memref<4x10x16xf32, #tpu.memory_space<vmem>>, vector<4x1x16xf32>,
    %c0_13 = arith.constant 0 : index
    %c0_14 = arith.constant 0 : index
    %c0_15 = arith.constant 0 : index
    %c1_16 = arith.constant 1 : index
    %c0_17 = arith.constant 0 : index
    %6 = vector.load %arg3[%c0_13, %c0_14, %c0_15, %c1_16, %c0_17] : memref<1x1x4x2x16xf32, #tpu.memory_space<vmem>>, vector<1x1x4x1x16xf32>
    %7 = vector.shape_cast %6 : vector<1x1x4x1x16xf32> to vector<4x1x16xf32>
    %c0_18 = arith.constant 0 : index
    %c9 = arith.constant 9 : index
    %c0_19 = arith.constant 0 : index
    %8 = vector.load %arg7[%c0_18, %c9, %c0_19] : memref<4x10x16xf32, #tpu.memory_space<vmem>>, vector<4x1x16xf32>
    tpu.vector_store %arg7[%c0_18, %c9, %c0_19], %7 {strides = array<i32>} : memref<4x10x16xf32, #tpu.memory_space<vmem>>, vector<4x1x16xf32>,
    %9 = tpu.iota {dimensions = array<i32: 1>} : vector<10x16xi32>
    %c1_i32 = arith.constant 1 : i32
    %10 = vector.broadcast %c1_i32 : i32 to vector<10x16xi32>
    %11 = arith.cmpi sge, %9, %10 : vector<10x16xi32>
    %c15_i32 = arith.constant 15 : i32
    %12 = vector.broadcast %c15_i32 : i32 to vector<10x16xi32>
    %13 = arith.cmpi slt, %9, %12 : vector<10x16xi32>
    %c0_20 = arith.constant 0 : index
    %14 = memref.load %arg5[%c0_20] : memref<4xf32, #tpu.memory_space<smem>>
    %15 = vector.broadcast %14 : f32 to vector<8x16xf32>
    %c1_21 = arith.constant 1 : index
    %16 = memref.load %arg5[%c1_21] : memref<4xf32, #tpu.memory_space<smem>>
    %17 = vector.broadcast %16 : f32 to vector<8x16xf32>
    %c2 = arith.constant 2 : index
    %18 = memref.load %arg5[%c2] : memref<4xf32, #tpu.memory_space<smem>>
    %19 = vector.broadcast %18 : f32 to vector<8x16xf32>
    %c3 = arith.constant 3 : index
    %20 = memref.load %arg5[%c3] : memref<4xf32, #tpu.memory_space<smem>>
    %21 = vector.broadcast %20 : f32 to vector<8x16xf32>
    %c0_22 = arith.constant 0 : index
    %c0_23 = arith.constant 0 : index
    %c0_24 = arith.constant 0 : index
    %22 = vector.load %arg7[%c0_22, %c0_23, %c0_24] : memref<4x10x16xf32, #tpu.memory_space<vmem>>, vector<1x10x16xf32>
    %23 = vector.shape_cast %22 : vector<1x10x16xf32> to vector<10x16xf32>
    %c1_i32_25 = arith.constant 1 : i32
    %24 = tpu.dynamic_rotate %23 by %c1_i32_25 dim 1 : vector<10x16xf32>, i32 -> vector<10x16xf32>
    %cst = arith.constant 0.000000e+00 : f32
    %25 = vector.broadcast %cst : f32 to vector<10x16xf32>
    %26 = arith.select %11, %24, %25 : vector<10x16xi1>, vector<10x16xf32>
    %27 = vector.extract_strided_slice %26 {offsets = [0, 0], sizes = [8, 16], strides = [1, 1]} : vector<10x16xf32> to vector<8x16xf32>
    %c0_26 = arith.constant 0 : index
    %28 = memref.load %arg4[%c0_26] : memref<144xf32, #tpu.memory_space<smem>>
    %29 = vector.broadcast %28 : f32 to vector<8x16xf32>
    %30 = arith.mulf %27, %29 : vector<8x16xf32>
    %31 = arith.addf %15, %30 : vector<8x16xf32>
    %c36 = arith.constant 36 : index
    %32 = memref.load %arg4[%c36] : memref<144xf32, #tpu.memory_space<smem>>
    %33 = vector.broadcast %32 : f32 to vector<8x16xf32>
    %34 = arith.mulf %27, %33 : vector<8x16xf32>
    %35 = arith.addf %17, %34 : vector<8x16xf32>
    %c72 = arith.constant 72 : index
    %36 = memref.load %arg4[%c72] : memref<144xf32, #tpu.memory_space<smem>>
    %37 = vector.broadcast %36 : f32 to vector<8x16xf32>
    %38 = arith.mulf %27, %37 : vector<8x16xf32>
    %39 = arith.addf %19, %38 : vector<8x16xf32>
    %c108 = arith.constant 108 : index
    %40 = memref.load %arg4[%c108] : memref<144xf32, #tpu.memory_space<smem>>
    %41 = vector.broadcast %40 : f32 to vector<8x16xf32>
    %42 = arith.mulf %27, %41 : vector<8x16xf32>
    %43 = arith.addf %21, %42 : vector<8x16xf32>
    %44 = vector.extract_strided_slice %26 {offsets = [1, 0], sizes = [8, 16], strides = [1, 1]} : vector<10x16xf32> to vector<8x16xf32>
    %c3_27 = arith.constant 3 : index
    %45 = memref.load %arg4[%c3_27] : memref<144xf32, #tpu.memory_space<smem>>
    %46 = vector.broadcast %45 : f32 to vector<8x16xf32>
    %47 = arith.mulf %44, %46 : vector<8x16xf32>
    %48 = arith.addf %31, %47 : vector<8x16xf32>
    %c39 = arith.constant 39 : index
    %49 = memref.load %arg4[%c39] : memref<144xf32, #tpu.memory_space<smem>>
    %50 = vector.broadcast %49 : f32 to vector<8x16xf32>
    %51 = arith.mulf %44, %50 : vector<8x16xf32>
    %52 = arith.addf %35, %51 : vector<8x16xf32>
    %c75 = arith.constant 75 : index
    %53 = memref.load %arg4[%c75] : memref<144xf32, #tpu.memory_space<smem>>
    %54 = vector.broadcast %53 : f32 to vector<8x16xf32>
    %55 = arith.mulf %44, %54 : vector<8x16xf32>
    %56 = arith.addf %39, %55 : vector<8x16xf32>
    %c111 = arith.constant 111 : index
    %57 = memref.load %arg4[%c111] : memref<144xf32, #tpu.memory_space<smem>>
    %58 = vector.broadcast %57 : f32 to vector<8x16xf32>
    %59 = arith.mulf %44, %58 : vector<8x16xf32>
    %60 = arith.addf %43, %59 : vector<8x16xf32>
    %61 = vector.extract_strided_slice %26 {offsets = [2, 0], sizes = [8, 16], strides = [1, 1]} : vector<10x16xf32> to vector<8x16xf32>
    %c6 = arith.constant 6 : index
    %62 = memref.load %arg4[%c6] : memref<144xf32, #tpu.memory_space<smem>>
    %63 = vector.broadcast %62 : f32 to vector<8x16xf32>
    %64 = arith.mulf %61, %63 : vector<8x16xf32>
    %65 = arith.addf %48, %64 : vector<8x16xf32>
    %c42 = arith.constant 42 : index
    %66 = memref.load %arg4[%c42] : memref<144xf32, #tpu.memory_space<smem>>
    %67 = vector.broadcast %66 : f32 to vector<8x16xf32>
    %68 = arith.mulf %61, %67 : vector<8x16xf32>
    %69 = arith.addf %52, %68 : vector<8x16xf32>
    %c78 = arith.constant 78 : index
    %70 = memref.load %arg4[%c78] : memref<144xf32, #tpu.memory_space<smem>>
    %71 = vector.broadcast %70 : f32 to vector<8x16xf32>
    %72 = arith.mulf %61, %71 : vector<8x16xf32>
    %73 = arith.addf %56, %72 : vector<8x16xf32>
    %c114 = arith.constant 114 : index
    %74 = memref.load %arg4[%c114] : memref<144xf32, #tpu.memory_space<smem>>
    %75 = vector.broadcast %74 : f32 to vector<8x16xf32>
    %76 = arith.mulf %61, %75 : vector<8x16xf32>
    %77 = arith.addf %60, %76 : vector<8x16xf32>
    %78 = vector.extract_strided_slice %23 {offsets = [0, 0], sizes = [8, 16], strides = [1, 1]} : vector<10x16xf32> to vector<8x16xf32>
    %c1_28 = arith.constant 1 : index
    %79 = memref.load %arg4[%c1_28] : memref<144xf32, #tpu.memory_space<smem>>
    %80 = vector.broadcast %79 : f32 to vector<8x16xf32>
    %81 = arith.mulf %78, %80 : vector<8x16xf32>
    %82 = arith.addf %65, %81 : vector<8x16xf32>
    %c37 = arith.constant 37 : index
    %83 = memref.load %arg4[%c37] : memref<144xf32, #tpu.memory_space<smem>>
    %84 = vector.broadcast %83 : f32 to vector<8x16xf32>
    %85 = arith.mulf %78, %84 : vector<8x16xf32>
    %86 = arith.addf %69, %85 : vector<8x16xf32>
    %c73 = arith.constant 73 : index
    %87 = memref.load %arg4[%c73] : memref<144xf32, #tpu.memory_space<smem>>
    %88 = vector.broadcast %87 : f32 to vector<8x16xf32>
    %89 = arith.mulf %78, %88 : vector<8x16xf32>
    %90 = arith.addf %73, %89 : vector<8x16xf32>
    %c109 = arith.constant 109 : index
    %91 = memref.load %arg4[%c109] : memref<144xf32, #tpu.memory_space<smem>>
    %92 = vector.broadcast %91 : f32 to vector<8x16xf32>
    %93 = arith.mulf %78, %92 : vector<8x16xf32>
    %94 = arith.addf %77, %93 : vector<8x16xf32>
    %95 = vector.extract_strided_slice %23 {offsets = [1, 0], sizes = [8, 16], strides = [1, 1]} : vector<10x16xf32> to vector<8x16xf32>
    %c4 = arith.constant 4 : index
    %96 = memref.load %arg4[%c4] : memref<144xf32, #tpu.memory_space<smem>>
    %97 = vector.broadcast %96 : f32 to vector<8x16xf32>
    %98 = arith.mulf %95, %97 : vector<8x16xf32>
    %99 = arith.addf %82, %98 : vector<8x16xf32>
    %c40 = arith.constant 40 : index
    %100 = memref.load %arg4[%c40] : memref<144xf32, #tpu.memory_space<smem>>
    %101 = vector.broadcast %100 : f32 to vector<8x16xf32>
    %102 = arith.mulf %95, %101 : vector<8x16xf32>
    %103 = arith.addf %86, %102 : vector<8x16xf32>
    %c76 = arith.constant 76 : index
    %104 = memref.load %arg4[%c76] : memref<144xf32, #tpu.memory_space<smem>>
    %105 = vector.broadcast %104 : f32 to vector<8x16xf32>
    %106 = arith.mulf %95, %105 : vector<8x16xf32>
    %107 = arith.addf %90, %106 : vector<8x16xf32>
    %c112 = arith.constant 112 : index
    %108 = memref.load %arg4[%c112] : memref<144xf32, #tpu.memory_space<smem>>
    %109 = vector.broadcast %108 : f32 to vector<8x16xf32>
    %110 = arith.mulf %95, %109 : vector<8x16xf32>
    %111 = arith.addf %94, %110 : vector<8x16xf32>
    %112 = vector.extract_strided_slice %23 {offsets = [2, 0], sizes = [8, 16], strides = [1, 1]} : vector<10x16xf32> to vector<8x16xf32>
    %c7 = arith.constant 7 : index
    %113 = memref.load %arg4[%c7] : memref<144xf32, #tpu.memory_space<smem>>
    %114 = vector.broadcast %113 : f32 to vector<8x16xf32>
    %115 = arith.mulf %112, %114 : vector<8x16xf32>
    %116 = arith.addf %99, %115 : vector<8x16xf32>
    %c43 = arith.constant 43 : index
    %117 = memref.load %arg4[%c43] : memref<144xf32, #tpu.memory_space<smem>>
    %118 = vector.broadcast %117 : f32 to vector<8x16xf32>
    %119 = arith.mulf %112, %118 : vector<8x16xf32>
    %120 = arith.addf %103, %119 : vector<8x16xf32>
    %c79 = arith.constant 79 : index
    %121 = memref.load %arg4[%c79] : memref<144xf32, #tpu.memory_space<smem>>
    %122 = vector.broadcast %121 : f32 to vector<8x16xf32>
    %123 = arith.mulf %112, %122 : vector<8x16xf32>
    %124 = arith.addf %107, %123 : vector<8x16xf32>
    %c115 = arith.constant 115 : index
    %125 = memref.load %arg4[%c115] : memref<144xf32, #tpu.memory_space<smem>>
    %126 = vector.broadcast %125 : f32 to vector<8x16xf32>
    %127 = arith.mulf %112, %126 : vector<8x16xf32>
    %128 = arith.addf %111, %127 : vector<8x16xf32>
    %c15_i32_29 = arith.constant 15 : i32
    %129 = tpu.dynamic_rotate %23 by %c15_i32_29 dim 1 : vector<10x16xf32>, i32 -> vector<10x16xf32>
    %cst_30 = arith.constant 0.000000e+00 : f32
    %130 = vector.broadcast %cst_30 : f32 to vector<10x16xf32>
    %131 = arith.select %13, %129, %130 : vector<10x16xi1>, vector<10x16xf32>
    %132 = vector.extract_strided_slice %131 {offsets = [0, 0], sizes = [8, 16], strides = [1, 1]} : vector<10x16xf32> to vector<8x16xf32>
    %c2_31 = arith.constant 2 : index
    %133 = memref.load %arg4[%c2_31] : memref<144xf32, #tpu.memory_space<smem>>
    %134 = vector.broadcast %133 : f32 to vector<8x16xf32>
    %135 = arith.mulf %132, %134 : vector<8x16xf32>
    %136 = arith.addf %116, %135 : vector<8x16xf32>
    %c38 = arith.constant 38 : index
    %137 = memref.load %arg4[%c38] : memref<144xf32, #tpu.memory_space<smem>>
    %138 = vector.broadcast %137 : f32 to vector<8x16xf32>
    %139 = arith.mulf %132, %138 : vector<8x16xf32>
    %140 = arith.addf %120, %139 : vector<8x16xf32>
    %c74 = arith.constant 74 : index
    %141 = memref.load %arg4[%c74] : memref<144xf32, #tpu.memory_space<smem>>
    %142 = vector.broadcast %141 : f32 to vector<8x16xf32>
    %143 = arith.mulf %132, %142 : vector<8x16xf32>
    %144 = arith.addf %124, %143 : vector<8x16xf32>
    %c110 = arith.constant 110 : index
    %145 = memref.load %arg4[%c110] : memref<144xf32, #tpu.memory_space<smem>>
    %146 = vector.broadcast %145 : f32 to vector<8x16xf32>
    %147 = arith.mulf %132, %146 : vector<8x16xf32>
    %148 = arith.addf %128, %147 : vector<8x16xf32>
    %149 = vector.extract_strided_slice %131 {offsets = [1, 0], sizes = [8, 16], strides = [1, 1]} : vector<10x16xf32> to vector<8x16xf32>
    %c5 = arith.constant 5 : index
    %150 = memref.load %arg4[%c5] : memref<144xf32, #tpu.memory_space<smem>>
    %151 = vector.broadcast %150 : f32 to vector<8x16xf32>
    %152 = arith.mulf %149, %151 : vector<8x16xf32>
    %153 = arith.addf %136, %152 : vector<8x16xf32>
    %c41 = arith.constant 41 : index
    %154 = memref.load %arg4[%c41] : memref<144xf32, #tpu.memory_space<smem>>
    %155 = vector.broadcast %154 : f32 to vector<8x16xf32>
    %156 = arith.mulf %149, %155 : vector<8x16xf32>
    %157 = arith.addf %140, %156 : vector<8x16xf32>
    %c77 = arith.constant 77 : index
    %158 = memref.load %arg4[%c77] : memref<144xf32, #tpu.memory_space<smem>>
    %159 = vector.broadcast %158 : f32 to vector<8x16xf32>
    %160 = arith.mulf %149, %159 : vector<8x16xf32>
    %161 = arith.addf %144, %160 : vector<8x16xf32>
    %c113 = arith.constant 113 : index
    %162 = memref.load %arg4[%c113] : memref<144xf32, #tpu.memory_space<smem>>
    %163 = vector.broadcast %162 : f32 to vector<8x16xf32>
    %164 = arith.mulf %149, %163 : vector<8x16xf32>
    %165 = arith.addf %148, %164 : vector<8x16xf32>
    %166 = vector.extract_strided_slice %131 {offsets = [2, 0], sizes = [8, 16], strides = [1, 1]} : vector<10x16xf32> to vector<8x16xf32>
    %c8 = arith.constant 8 : index
    %167 = memref.load %arg4[%c8] : memref<144xf32, #tpu.memory_space<smem>>
    %168 = vector.broadcast %167 : f32 to vector<8x16xf32>
    %169 = arith.mulf %166, %168 : vector<8x16xf32>
    %170 = arith.addf %153, %169 : vector<8x16xf32>
    %c44 = arith.constant 44 : index
    %171 = memref.load %arg4[%c44] : memref<144xf32, #tpu.memory_space<smem>>
    %172 = vector.broadcast %171 : f32 to vector<8x16xf32>
    %173 = arith.mulf %166, %172 : vector<8x16xf32>
    %174 = arith.addf %157, %173 : vector<8x16xf32>
    %c80 = arith.constant 80 : index
    %175 = memref.load %arg4[%c80] : memref<144xf32, #tpu.memory_space<smem>>
    %176 = vector.broadcast %175 : f32 to vector<8x16xf32>
    %177 = arith.mulf %166, %176 : vector<8x16xf32>
    %178 = arith.addf %161, %177 : vector<8x16xf32>
    %c116 = arith.constant 116 : index
    %179 = memref.load %arg4[%c116] : memref<144xf32, #tpu.memory_space<smem>>
    %180 = vector.broadcast %179 : f32 to vector<8x16xf32>
    %181 = arith.mulf %166, %180 : vector<8x16xf32>
    %182 = arith.addf %165, %181 : vector<8x16xf32>
    %c1_32 = arith.constant 1 : index
    %c0_33 = arith.constant 0 : index
    %c0_34 = arith.constant 0 : index
    %183 = vector.load %arg7[%c1_32, %c0_33, %c0_34] : memref<4x10x16xf32, #tpu.memory_space<vmem>>, vector<1x10x16xf32>
    %184 = vector.shape_cast %183 : vector<1x10x16xf32> to vector<10x16xf32>
    %c1_i32_35 = arith.constant 1 : i32
    %185 = tpu.dynamic_rotate %184 by %c1_i32_35 dim 1 : vector<10x16xf32>, i32 -> vector<10x16xf32>
    %cst_36 = arith.constant 0.000000e+00 : f32
    %186 = vector.broadcast %cst_36 : f32 to vector<10x16xf32>
    %187 = arith.select %11, %185, %186 : vector<10x16xi1>, vector<10x16xf32>
    %188 = vector.extract_strided_slice %187 {offsets = [0, 0], sizes = [8, 16], strides = [1, 1]} : vector<10x16xf32> to vector<8x16xf32>
    %c9_37 = arith.constant 9 : index
    %189 = memref.load %arg4[%c9_37] : memref<144xf32, #tpu.memory_space<smem>>
    %190 = vector.broadcast %189 : f32 to vector<8x16xf32>
    %191 = arith.mulf %188, %190 : vector<8x16xf32>
    %192 = arith.addf %170, %191 : vector<8x16xf32>
    %c45 = arith.constant 45 : index
    %193 = memref.load %arg4[%c45] : memref<144xf32, #tpu.memory_space<smem>>
    %194 = vector.broadcast %193 : f32 to vector<8x16xf32>
    %195 = arith.mulf %188, %194 : vector<8x16xf32>
    %196 = arith.addf %174, %195 : vector<8x16xf32>
    %c81 = arith.constant 81 : index
    %197 = memref.load %arg4[%c81] : memref<144xf32, #tpu.memory_space<smem>>
    %198 = vector.broadcast %197 : f32 to vector<8x16xf32>
    %199 = arith.mulf %188, %198 : vector<8x16xf32>
    %200 = arith.addf %178, %199 : vector<8x16xf32>
    %c117 = arith.constant 117 : index
    %201 = memref.load %arg4[%c117] : memref<144xf32, #tpu.memory_space<smem>>
    %202 = vector.broadcast %201 : f32 to vector<8x16xf32>
    %203 = arith.mulf %188, %202 : vector<8x16xf32>
    %204 = arith.addf %182, %203 : vector<8x16xf32>
    %205 = vector.extract_strided_slice %187 {offsets = [1, 0], sizes = [8, 16], strides = [1, 1]} : vector<10x16xf32> to vector<8x16xf32>
    %c12 = arith.constant 12 : index
    %206 = memref.load %arg4[%c12] : memref<144xf32, #tpu.memory_space<smem>>
    %207 = vector.broadcast %206 : f32 to vector<8x16xf32>
    %208 = arith.mulf %205, %207 : vector<8x16xf32>
    %209 = arith.addf %192, %208 : vector<8x16xf32>
    %c48 = arith.constant 48 : index
    %210 = memref.load %arg4[%c48] : memref<144xf32, #tpu.memory_space<smem>>
    %211 = vector.broadcast %210 : f32 to vector<8x16xf32>
    %212 = arith.mulf %205, %211 : vector<8x16xf32>
    %213 = arith.addf %196, %212 : vector<8x16xf32>
    %c84 = arith.constant 84 : index
    %214 = memref.load %arg4[%c84] : memref<144xf32, #tpu.memory_space<smem>>
    %215 = vector.broadcast %214 : f32 to vector<8x16xf32>
    %216 = arith.mulf %205, %215 : vector<8x16xf32>
    %217 = arith.addf %200, %216 : vector<8x16xf32>
    %c120 = arith.constant 120 : index
    %218 = memref.load %arg4[%c120] : memref<144xf32, #tpu.memory_space<smem>>
    %219 = vector.broadcast %218 : f32 to vector<8x16xf32>
    %220 = arith.mulf %205, %219 : vector<8x16xf32>
    %221 = arith.addf %204, %220 : vector<8x16xf32>
    %222 = vector.extract_strided_slice %187 {offsets = [2, 0], sizes = [8, 16], strides = [1, 1]} : vector<10x16xf32> to vector<8x16xf32>
    %c15 = arith.constant 15 : index
    %223 = memref.load %arg4[%c15] : memref<144xf32, #tpu.memory_space<smem>>
    %224 = vector.broadcast %223 : f32 to vector<8x16xf32>
    %225 = arith.mulf %222, %224 : vector<8x16xf32>
    %226 = arith.addf %209, %225 : vector<8x16xf32>
    %c51 = arith.constant 51 : index
    %227 = memref.load %arg4[%c51] : memref<144xf32, #tpu.memory_space<smem>>
    %228 = vector.broadcast %227 : f32 to vector<8x16xf32>
    %229 = arith.mulf %222, %228 : vector<8x16xf32>
    %230 = arith.addf %213, %229 : vector<8x16xf32>
    %c87 = arith.constant 87 : index
    %231 = memref.load %arg4[%c87] : memref<144xf32, #tpu.memory_space<smem>>
    %232 = vector.broadcast %231 : f32 to vector<8x16xf32>
    %233 = arith.mulf %222, %232 : vector<8x16xf32>
    %234 = arith.addf %217, %233 : vector<8x16xf32>
    %c123 = arith.constant 123 : index
    %235 = memref.load %arg4[%c123] : memref<144xf32, #tpu.memory_space<smem>>
    %236 = vector.broadcast %235 : f32 to vector<8x16xf32>
    %237 = arith.mulf %222, %236 : vector<8x16xf32>
    %238 = arith.addf %221, %237 : vector<8x16xf32>
    %239 = vector.extract_strided_slice %184 {offsets = [0, 0], sizes = [8, 16], strides = [1, 1]} : vector<10x16xf32> to vector<8x16xf32>
    %c10 = arith.constant 10 : index
    %240 = memref.load %arg4[%c10] : memref<144xf32, #tpu.memory_space<smem>>
    %241 = vector.broadcast %240 : f32 to vector<8x16xf32>
    %242 = arith.mulf %239, %241 : vector<8x16xf32>
    %243 = arith.addf %226, %242 : vector<8x16xf32>
    %c46 = arith.constant 46 : index
    %244 = memref.load %arg4[%c46] : memref<144xf32, #tpu.memory_space<smem>>
    %245 = vector.broadcast %244 : f32 to vector<8x16xf32>
    %246 = arith.mulf %239, %245 : vector<8x16xf32>
    %247 = arith.addf %230, %246 : vector<8x16xf32>
    %c82 = arith.constant 82 : index
    %248 = memref.load %arg4[%c82] : memref<144xf32, #tpu.memory_space<smem>>
    %249 = vector.broadcast %248 : f32 to vector<8x16xf32>
    %250 = arith.mulf %239, %249 : vector<8x16xf32>
    %251 = arith.addf %234, %250 : vector<8x16xf32>
    %c118 = arith.constant 118 : index
    %252 = memref.load %arg4[%c118] : memref<144xf32, #tpu.memory_space<smem>>
    %253 = vector.broadcast %252 : f32 to vector<8x16xf32>
    %254 = arith.mulf %239, %253 : vector<8x16xf32>
    %255 = arith.addf %238, %254 : vector<8x16xf32>
    %256 = vector.extract_strided_slice %184 {offsets = [1, 0], sizes = [8, 16], strides = [1, 1]} : vector<10x16xf32> to vector<8x16xf32>
    %c13 = arith.constant 13 : index
    %257 = memref.load %arg4[%c13] : memref<144xf32, #tpu.memory_space<smem>>
    %258 = vector.broadcast %257 : f32 to vector<8x16xf32>
    %259 = arith.mulf %256, %258 : vector<8x16xf32>
    %260 = arith.addf %243, %259 : vector<8x16xf32>
    %c49 = arith.constant 49 : index
    %261 = memref.load %arg4[%c49] : memref<144xf32, #tpu.memory_space<smem>>
    %262 = vector.broadcast %261 : f32 to vector<8x16xf32>
    %263 = arith.mulf %256, %262 : vector<8x16xf32>
    %264 = arith.addf %247, %263 : vector<8x16xf32>
    %c85 = arith.constant 85 : index
    %265 = memref.load %arg4[%c85] : memref<144xf32, #tpu.memory_space<smem>>
    %266 = vector.broadcast %265 : f32 to vector<8x16xf32>
    %267 = arith.mulf %256, %266 : vector<8x16xf32>
    %268 = arith.addf %251, %267 : vector<8x16xf32>
    %c121 = arith.constant 121 : index
    %269 = memref.load %arg4[%c121] : memref<144xf32, #tpu.memory_space<smem>>
    %270 = vector.broadcast %269 : f32 to vector<8x16xf32>
    %271 = arith.mulf %256, %270 : vector<8x16xf32>
    %272 = arith.addf %255, %271 : vector<8x16xf32>
    %273 = vector.extract_strided_slice %184 {offsets = [2, 0], sizes = [8, 16], strides = [1, 1]} : vector<10x16xf32> to vector<8x16xf32>
    %c16 = arith.constant 16 : index
    %274 = memref.load %arg4[%c16] : memref<144xf32, #tpu.memory_space<smem>>
    %275 = vector.broadcast %274 : f32 to vector<8x16xf32>
    %276 = arith.mulf %273, %275 : vector<8x16xf32>
    %277 = arith.addf %260, %276 : vector<8x16xf32>
    %c52 = arith.constant 52 : index
    %278 = memref.load %arg4[%c52] : memref<144xf32, #tpu.memory_space<smem>>
    %279 = vector.broadcast %278 : f32 to vector<8x16xf32>
    %280 = arith.mulf %273, %279 : vector<8x16xf32>
    %281 = arith.addf %264, %280 : vector<8x16xf32>
    %c88 = arith.constant 88 : index
    %282 = memref.load %arg4[%c88] : memref<144xf32, #tpu.memory_space<smem>>
    %283 = vector.broadcast %282 : f32 to vector<8x16xf32>
    %284 = arith.mulf %273, %283 : vector<8x16xf32>
    %285 = arith.addf %268, %284 : vector<8x16xf32>
    %c124 = arith.constant 124 : index
    %286 = memref.load %arg4[%c124] : memref<144xf32, #tpu.memory_space<smem>>
    %287 = vector.broadcast %286 : f32 to vector<8x16xf32>
    %288 = arith.mulf %273, %287 : vector<8x16xf32>
    %289 = arith.addf %272, %288 : vector<8x16xf32>
    %c15_i32_38 = arith.constant 15 : i32
    %290 = tpu.dynamic_rotate %184 by %c15_i32_38 dim 1 : vector<10x16xf32>, i32 -> vector<10x16xf32>
    %cst_39 = arith.constant 0.000000e+00 : f32
    %291 = vector.broadcast %cst_39 : f32 to vector<10x16xf32>
    %292 = arith.select %13, %290, %291 : vector<10x16xi1>, vector<10x16xf32>
    %293 = vector.extract_strided_slice %292 {offsets = [0, 0], sizes = [8, 16], strides = [1, 1]} : vector<10x16xf32> to vector<8x16xf32>
    %c11 = arith.constant 11 : index
    %294 = memref.load %arg4[%c11] : memref<144xf32, #tpu.memory_space<smem>>
    %295 = vector.broadcast %294 : f32 to vector<8x16xf32>
    %296 = arith.mulf %293, %295 : vector<8x16xf32>
    %297 = arith.addf %277, %296 : vector<8x16xf32>
    %c47 = arith.constant 47 : index
    %298 = memref.load %arg4[%c47] : memref<144xf32, #tpu.memory_space<smem>>
    %299 = vector.broadcast %298 : f32 to vector<8x16xf32>
    %300 = arith.mulf %293, %299 : vector<8x16xf32>
    %301 = arith.addf %281, %300 : vector<8x16xf32>
    %c83 = arith.constant 83 : index
    %302 = memref.load %arg4[%c83] : memref<144xf32, #tpu.memory_space<smem>>
    %303 = vector.broadcast %302 : f32 to vector<8x16xf32>
    %304 = arith.mulf %293, %303 : vector<8x16xf32>
    %305 = arith.addf %285, %304 : vector<8x16xf32>
    %c119 = arith.constant 119 : index
    %306 = memref.load %arg4[%c119] : memref<144xf32, #tpu.memory_space<smem>>
    %307 = vector.broadcast %306 : f32 to vector<8x16xf32>
    %308 = arith.mulf %293, %307 : vector<8x16xf32>
    %309 = arith.addf %289, %308 : vector<8x16xf32>
    %310 = vector.extract_strided_slice %292 {offsets = [1, 0], sizes = [8, 16], strides = [1, 1]} : vector<10x16xf32> to vector<8x16xf32>
    %c14 = arith.constant 14 : index
    %311 = memref.load %arg4[%c14] : memref<144xf32, #tpu.memory_space<smem>>
    %312 = vector.broadcast %311 : f32 to vector<8x16xf32>
    %313 = arith.mulf %310, %312 : vector<8x16xf32>
    %314 = arith.addf %297, %313 : vector<8x16xf32>
    %c50 = arith.constant 50 : index
    %315 = memref.load %arg4[%c50] : memref<144xf32, #tpu.memory_space<smem>>
    %316 = vector.broadcast %315 : f32 to vector<8x16xf32>
    %317 = arith.mulf %310, %316 : vector<8x16xf32>
    %318 = arith.addf %301, %317 : vector<8x16xf32>
    %c86 = arith.constant 86 : index
    %319 = memref.load %arg4[%c86] : memref<144xf32, #tpu.memory_space<smem>>
    %320 = vector.broadcast %319 : f32 to vector<8x16xf32>
    %321 = arith.mulf %310, %320 : vector<8x16xf32>
    %322 = arith.addf %305, %321 : vector<8x16xf32>
    %c122 = arith.constant 122 : index
    %323 = memref.load %arg4[%c122] : memref<144xf32, #tpu.memory_space<smem>>
    %324 = vector.broadcast %323 : f32 to vector<8x16xf32>
    %325 = arith.mulf %310, %324 : vector<8x16xf32>
    %326 = arith.addf %309, %325 : vector<8x16xf32>
    %327 = vector.extract_strided_slice %292 {offsets = [2, 0], sizes = [8, 16], strides = [1, 1]} : vector<10x16xf32> to vector<8x16xf32>
    %c17 = arith.constant 17 : index
    %328 = memref.load %arg4[%c17] : memref<144xf32, #tpu.memory_space<smem>>
    %329 = vector.broadcast %328 : f32 to vector<8x16xf32>
    %330 = arith.mulf %327, %329 : vector<8x16xf32>
    %331 = arith.addf %314, %330 : vector<8x16xf32>
    %c53 = arith.constant 53 : index
    %332 = memref.load %arg4[%c53] : memref<144xf32, #tpu.memory_space<smem>>
    %333 = vector.broadcast %332 : f32 to vector<8x16xf32>
    %334 = arith.mulf %327, %333 : vector<8x16xf32>
    %335 = arith.addf %318, %334 : vector<8x16xf32>
    %c89 = arith.constant 89 : index
    %336 = memref.load %arg4[%c89] : memref<144xf32, #tpu.memory_space<smem>>
    %337 = vector.broadcast %336 : f32 to vector<8x16xf32>
    %338 = arith.mulf %327, %337 : vector<8x16xf32>
    %339 = arith.addf %322, %338 : vector<8x16xf32>
    %c125 = arith.constant 125 : index
    %340 = memref.load %arg4[%c125] : memref<144xf32, #tpu.memory_space<smem>>
    %341 = vector.broadcast %340 : f32 to vector<8x16xf32>
    %342 = arith.mulf %327, %341 : vector<8x16xf32>
    %343 = arith.addf %326, %342 : vector<8x16xf32>
    %c2_40 = arith.constant 2 : index
    %c0_41 = arith.constant 0 : index
    %c0_42 = arith.constant 0 : index
    %344 = vector.load %arg7[%c2_40, %c0_41, %c0_42] : memref<4x10x16xf32, #tpu.memory_space<vmem>>, vector<1x10x16xf32>
    %345 = vector.shape_cast %344 : vector<1x10x16xf32> to vector<10x16xf32>
    %c1_i32_43 = arith.constant 1 : i32
    %346 = tpu.dynamic_rotate %345 by %c1_i32_43 dim 1 : vector<10x16xf32>, i32 -> vector<10x16xf32>
    %cst_44 = arith.constant 0.000000e+00 : f32
    %347 = vector.broadcast %cst_44 : f32 to vector<10x16xf32>
    %348 = arith.select %11, %346, %347 : vector<10x16xi1>, vector<10x16xf32>
    %349 = vector.extract_strided_slice %348 {offsets = [0, 0], sizes = [8, 16], strides = [1, 1]} : vector<10x16xf32> to vector<8x16xf32>
    %c18 = arith.constant 18 : index
    %350 = memref.load %arg4[%c18] : memref<144xf32, #tpu.memory_space<smem>>
    %351 = vector.broadcast %350 : f32 to vector<8x16xf32>
    %352 = arith.mulf %349, %351 : vector<8x16xf32>
    %353 = arith.addf %331, %352 : vector<8x16xf32>
    %c54 = arith.constant 54 : index
    %354 = memref.load %arg4[%c54] : memref<144xf32, #tpu.memory_space<smem>>
    %355 = vector.broadcast %354 : f32 to vector<8x16xf32>
    %356 = arith.mulf %349, %355 : vector<8x16xf32>
    %357 = arith.addf %335, %356 : vector<8x16xf32>
    %c90 = arith.constant 90 : index
    %358 = memref.load %arg4[%c90] : memref<144xf32, #tpu.memory_space<smem>>
    %359 = vector.broadcast %358 : f32 to vector<8x16xf32>
    %360 = arith.mulf %349, %359 : vector<8x16xf32>
    %361 = arith.addf %339, %360 : vector<8x16xf32>
    %c126 = arith.constant 126 : index
    %362 = memref.load %arg4[%c126] : memref<144xf32, #tpu.memory_space<smem>>
    %363 = vector.broadcast %362 : f32 to vector<8x16xf32>
    %364 = arith.mulf %349, %363 : vector<8x16xf32>
    %365 = arith.addf %343, %364 : vector<8x16xf32>
    %366 = vector.extract_strided_slice %348 {offsets = [1, 0], sizes = [8, 16], strides = [1, 1]} : vector<10x16xf32> to vector<8x16xf32>
    %c21 = arith.constant 21 : index
    %367 = memref.load %arg4[%c21] : memref<144xf32, #tpu.memory_space<smem>>
    %368 = vector.broadcast %367 : f32 to vector<8x16xf32>
    %369 = arith.mulf %366, %368 : vector<8x16xf32>
    %370 = arith.addf %353, %369 : vector<8x16xf32>
    %c57 = arith.constant 57 : index
    %371 = memref.load %arg4[%c57] : memref<144xf32, #tpu.memory_space<smem>>
    %372 = vector.broadcast %371 : f32 to vector<8x16xf32>
    %373 = arith.mulf %366, %372 : vector<8x16xf32>
    %374 = arith.addf %357, %373 : vector<8x16xf32>
    %c93 = arith.constant 93 : index
    %375 = memref.load %arg4[%c93] : memref<144xf32, #tpu.memory_space<smem>>
    %376 = vector.broadcast %375 : f32 to vector<8x16xf32>
    %377 = arith.mulf %366, %376 : vector<8x16xf32>
    %378 = arith.addf %361, %377 : vector<8x16xf32>
    %c129 = arith.constant 129 : index
    %379 = memref.load %arg4[%c129] : memref<144xf32, #tpu.memory_space<smem>>
    %380 = vector.broadcast %379 : f32 to vector<8x16xf32>
    %381 = arith.mulf %366, %380 : vector<8x16xf32>
    %382 = arith.addf %365, %381 : vector<8x16xf32>
    %383 = vector.extract_strided_slice %348 {offsets = [2, 0], sizes = [8, 16], strides = [1, 1]} : vector<10x16xf32> to vector<8x16xf32>
    %c24 = arith.constant 24 : index
    %384 = memref.load %arg4[%c24] : memref<144xf32, #tpu.memory_space<smem>>
    %385 = vector.broadcast %384 : f32 to vector<8x16xf32>
    %386 = arith.mulf %383, %385 : vector<8x16xf32>
    %387 = arith.addf %370, %386 : vector<8x16xf32>
    %c60 = arith.constant 60 : index
    %388 = memref.load %arg4[%c60] : memref<144xf32, #tpu.memory_space<smem>>
    %389 = vector.broadcast %388 : f32 to vector<8x16xf32>
    %390 = arith.mulf %383, %389 : vector<8x16xf32>
    %391 = arith.addf %374, %390 : vector<8x16xf32>
    %c96 = arith.constant 96 : index
    %392 = memref.load %arg4[%c96] : memref<144xf32, #tpu.memory_space<smem>>
    %393 = vector.broadcast %392 : f32 to vector<8x16xf32>
    %394 = arith.mulf %383, %393 : vector<8x16xf32>
    %395 = arith.addf %378, %394 : vector<8x16xf32>
    %c132 = arith.constant 132 : index
    %396 = memref.load %arg4[%c132] : memref<144xf32, #tpu.memory_space<smem>>
    %397 = vector.broadcast %396 : f32 to vector<8x16xf32>
    %398 = arith.mulf %383, %397 : vector<8x16xf32>
    %399 = arith.addf %382, %398 : vector<8x16xf32>
    %400 = vector.extract_strided_slice %345 {offsets = [0, 0], sizes = [8, 16], strides = [1, 1]} : vector<10x16xf32> to vector<8x16xf32>
    %c19 = arith.constant 19 : index
    %401 = memref.load %arg4[%c19] : memref<144xf32, #tpu.memory_space<smem>>
    %402 = vector.broadcast %401 : f32 to vector<8x16xf32>
    %403 = arith.mulf %400, %402 : vector<8x16xf32>
    %404 = arith.addf %387, %403 : vector<8x16xf32>
    %c55 = arith.constant 55 : index
    %405 = memref.load %arg4[%c55] : memref<144xf32, #tpu.memory_space<smem>>
    %406 = vector.broadcast %405 : f32 to vector<8x16xf32>
    %407 = arith.mulf %400, %406 : vector<8x16xf32>
    %408 = arith.addf %391, %407 : vector<8x16xf32>
    %c91 = arith.constant 91 : index
    %409 = memref.load %arg4[%c91] : memref<144xf32, #tpu.memory_space<smem>>
    %410 = vector.broadcast %409 : f32 to vector<8x16xf32>
    %411 = arith.mulf %400, %410 : vector<8x16xf32>
    %412 = arith.addf %395, %411 : vector<8x16xf32>
    %c127 = arith.constant 127 : index
    %413 = memref.load %arg4[%c127] : memref<144xf32, #tpu.memory_space<smem>>
    %414 = vector.broadcast %413 : f32 to vector<8x16xf32>
    %415 = arith.mulf %400, %414 : vector<8x16xf32>
    %416 = arith.addf %399, %415 : vector<8x16xf32>
    %417 = vector.extract_strided_slice %345 {offsets = [1, 0], sizes = [8, 16], strides = [1, 1]} : vector<10x16xf32> to vector<8x16xf32>
    %c22 = arith.constant 22 : index
    %418 = memref.load %arg4[%c22] : memref<144xf32, #tpu.memory_space<smem>>
    %419 = vector.broadcast %418 : f32 to vector<8x16xf32>
    %420 = arith.mulf %417, %419 : vector<8x16xf32>
    %421 = arith.addf %404, %420 : vector<8x16xf32>
    %c58 = arith.constant 58 : index
    %422 = memref.load %arg4[%c58] : memref<144xf32, #tpu.memory_space<smem>>
    %423 = vector.broadcast %422 : f32 to vector<8x16xf32>
    %424 = arith.mulf %417, %423 : vector<8x16xf32>
    %425 = arith.addf %408, %424 : vector<8x16xf32>
    %c94 = arith.constant 94 : index
    %426 = memref.load %arg4[%c94] : memref<144xf32, #tpu.memory_space<smem>>
    %427 = vector.broadcast %426 : f32 to vector<8x16xf32>
    %428 = arith.mulf %417, %427 : vector<8x16xf32>
    %429 = arith.addf %412, %428 : vector<8x16xf32>
    %c130 = arith.constant 130 : index
    %430 = memref.load %arg4[%c130] : memref<144xf32, #tpu.memory_space<smem>>
    %431 = vector.broadcast %430 : f32 to vector<8x16xf32>
    %432 = arith.mulf %417, %431 : vector<8x16xf32>
    %433 = arith.addf %416, %432 : vector<8x16xf32>
    %434 = vector.extract_strided_slice %345 {offsets = [2, 0], sizes = [8, 16], strides = [1, 1]} : vector<10x16xf32> to vector<8x16xf32>
    %c25 = arith.constant 25 : index
    %435 = memref.load %arg4[%c25] : memref<144xf32, #tpu.memory_space<smem>>
    %436 = vector.broadcast %435 : f32 to vector<8x16xf32>
    %437 = arith.mulf %434, %436 : vector<8x16xf32>
    %438 = arith.addf %421, %437 : vector<8x16xf32>
    %c61 = arith.constant 61 : index
    %439 = memref.load %arg4[%c61] : memref<144xf32, #tpu.memory_space<smem>>
    %440 = vector.broadcast %439 : f32 to vector<8x16xf32>
    %441 = arith.mulf %434, %440 : vector<8x16xf32>
    %442 = arith.addf %425, %441 : vector<8x16xf32>
    %c97 = arith.constant 97 : index
    %443 = memref.load %arg4[%c97] : memref<144xf32, #tpu.memory_space<smem>>
    %444 = vector.broadcast %443 : f32 to vector<8x16xf32>
    %445 = arith.mulf %434, %444 : vector<8x16xf32>
    %446 = arith.addf %429, %445 : vector<8x16xf32>
    %c133 = arith.constant 133 : index
    %447 = memref.load %arg4[%c133] : memref<144xf32, #tpu.memory_space<smem>>
    %448 = vector.broadcast %447 : f32 to vector<8x16xf32>
    %449 = arith.mulf %434, %448 : vector<8x16xf32>
    %450 = arith.addf %433, %449 : vector<8x16xf32>
    %c15_i32_45 = arith.constant 15 : i32
    %451 = tpu.dynamic_rotate %345 by %c15_i32_45 dim 1 : vector<10x16xf32>, i32 -> vector<10x16xf32>
    %cst_46 = arith.constant 0.000000e+00 : f32
    %452 = vector.broadcast %cst_46 : f32 to vector<10x16xf32>
    %453 = arith.select %13, %451, %452 : vector<10x16xi1>, vector<10x16xf32>
    %454 = vector.extract_strided_slice %453 {offsets = [0, 0], sizes = [8, 16], strides = [1, 1]} : vector<10x16xf32> to vector<8x16xf32>
    %c20 = arith.constant 20 : index
    %455 = memref.load %arg4[%c20] : memref<144xf32, #tpu.memory_space<smem>>
    %456 = vector.broadcast %455 : f32 to vector<8x16xf32>
    %457 = arith.mulf %454, %456 : vector<8x16xf32>
    %458 = arith.addf %438, %457 : vector<8x16xf32>
    %c56 = arith.constant 56 : index
    %459 = memref.load %arg4[%c56] : memref<144xf32, #tpu.memory_space<smem>>
    %460 = vector.broadcast %459 : f32 to vector<8x16xf32>
    %461 = arith.mulf %454, %460 : vector<8x16xf32>
    %462 = arith.addf %442, %461 : vector<8x16xf32>
    %c92 = arith.constant 92 : index
    %463 = memref.load %arg4[%c92] : memref<144xf32, #tpu.memory_space<smem>>
    %464 = vector.broadcast %463 : f32 to vector<8x16xf32>
    %465 = arith.mulf %454, %464 : vector<8x16xf32>
    %466 = arith.addf %446, %465 : vector<8x16xf32>
    %c128 = arith.constant 128 : index
    %467 = memref.load %arg4[%c128] : memref<144xf32, #tpu.memory_space<smem>>
    %468 = vector.broadcast %467 : f32 to vector<8x16xf32>
    %469 = arith.mulf %454, %468 : vector<8x16xf32>
    %470 = arith.addf %450, %469 : vector<8x16xf32>
    %471 = vector.extract_strided_slice %453 {offsets = [1, 0], sizes = [8, 16], strides = [1, 1]} : vector<10x16xf32> to vector<8x16xf32>
    %c23 = arith.constant 23 : index
    %472 = memref.load %arg4[%c23] : memref<144xf32, #tpu.memory_space<smem>>
    %473 = vector.broadcast %472 : f32 to vector<8x16xf32>
    %474 = arith.mulf %471, %473 : vector<8x16xf32>
    %475 = arith.addf %458, %474 : vector<8x16xf32>
    %c59 = arith.constant 59 : index
    %476 = memref.load %arg4[%c59] : memref<144xf32, #tpu.memory_space<smem>>
    %477 = vector.broadcast %476 : f32 to vector<8x16xf32>
    %478 = arith.mulf %471, %477 : vector<8x16xf32>
    %479 = arith.addf %462, %478 : vector<8x16xf32>
    %c95 = arith.constant 95 : index
    %480 = memref.load %arg4[%c95] : memref<144xf32, #tpu.memory_space<smem>>
    %481 = vector.broadcast %480 : f32 to vector<8x16xf32>
    %482 = arith.mulf %471, %481 : vector<8x16xf32>
    %483 = arith.addf %466, %482 : vector<8x16xf32>
    %c131 = arith.constant 131 : index
    %484 = memref.load %arg4[%c131] : memref<144xf32, #tpu.memory_space<smem>>
    %485 = vector.broadcast %484 : f32 to vector<8x16xf32>
    %486 = arith.mulf %471, %485 : vector<8x16xf32>
    %487 = arith.addf %470, %486 : vector<8x16xf32>
    %488 = vector.extract_strided_slice %453 {offsets = [2, 0], sizes = [8, 16], strides = [1, 1]} : vector<10x16xf32> to vector<8x16xf32>
    %c26 = arith.constant 26 : index
    %489 = memref.load %arg4[%c26] : memref<144xf32, #tpu.memory_space<smem>>
    %490 = vector.broadcast %489 : f32 to vector<8x16xf32>
    %491 = arith.mulf %488, %490 : vector<8x16xf32>
    %492 = arith.addf %475, %491 : vector<8x16xf32>
    %c62 = arith.constant 62 : index
    %493 = memref.load %arg4[%c62] : memref<144xf32, #tpu.memory_space<smem>>
    %494 = vector.broadcast %493 : f32 to vector<8x16xf32>
    %495 = arith.mulf %488, %494 : vector<8x16xf32>
    %496 = arith.addf %479, %495 : vector<8x16xf32>
    %c98 = arith.constant 98 : index
    %497 = memref.load %arg4[%c98] : memref<144xf32, #tpu.memory_space<smem>>
    %498 = vector.broadcast %497 : f32 to vector<8x16xf32>
    %499 = arith.mulf %488, %498 : vector<8x16xf32>
    %500 = arith.addf %483, %499 : vector<8x16xf32>
    %c134 = arith.constant 134 : index
    %501 = memref.load %arg4[%c134] : memref<144xf32, #tpu.memory_space<smem>>
    %502 = vector.broadcast %501 : f32 to vector<8x16xf32>
    %503 = arith.mulf %488, %502 : vector<8x16xf32>
    %504 = arith.addf %487, %503 : vector<8x16xf32>
    %c3_47 = arith.constant 3 : index
    %c0_48 = arith.constant 0 : index
    %c0_49 = arith.constant 0 : index
    %505 = vector.load %arg7[%c3_47, %c0_48, %c0_49] : memref<4x10x16xf32, #tpu.memory_space<vmem>>, vector<1x10x16xf32>
    %506 = vector.shape_cast %505 : vector<1x10x16xf32> to vector<10x16xf32>
    %c1_i32_50 = arith.constant 1 : i32
    %507 = tpu.dynamic_rotate %506 by %c1_i32_50 dim 1 : vector<10x16xf32>, i32 -> vector<10x16xf32>
    %cst_51 = arith.constant 0.000000e+00 : f32
    %508 = vector.broadcast %cst_51 : f32 to vector<10x16xf32>
    %509 = arith.select %11, %507, %508 : vector<10x16xi1>, vector<10x16xf32>
    %510 = vector.extract_strided_slice %509 {offsets = [0, 0], sizes = [8, 16], strides = [1, 1]} : vector<10x16xf32> to vector<8x16xf32>
    %c27 = arith.constant 27 : index
    %511 = memref.load %arg4[%c27] : memref<144xf32, #tpu.memory_space<smem>>
    %512 = vector.broadcast %511 : f32 to vector<8x16xf32>
    %513 = arith.mulf %510, %512 : vector<8x16xf32>
    %514 = arith.addf %492, %513 : vector<8x16xf32>
    %c63 = arith.constant 63 : index
    %515 = memref.load %arg4[%c63] : memref<144xf32, #tpu.memory_space<smem>>
    %516 = vector.broadcast %515 : f32 to vector<8x16xf32>
    %517 = arith.mulf %510, %516 : vector<8x16xf32>
    %518 = arith.addf %496, %517 : vector<8x16xf32>
    %c99 = arith.constant 99 : index
    %519 = memref.load %arg4[%c99] : memref<144xf32, #tpu.memory_space<smem>>
    %520 = vector.broadcast %519 : f32 to vector<8x16xf32>
    %521 = arith.mulf %510, %520 : vector<8x16xf32>
    %522 = arith.addf %500, %521 : vector<8x16xf32>
    %c135 = arith.constant 135 : index
    %523 = memref.load %arg4[%c135] : memref<144xf32, #tpu.memory_space<smem>>
    %524 = vector.broadcast %523 : f32 to vector<8x16xf32>
    %525 = arith.mulf %510, %524 : vector<8x16xf32>
    %526 = arith.addf %504, %525 : vector<8x16xf32>
    %527 = vector.extract_strided_slice %509 {offsets = [1, 0], sizes = [8, 16], strides = [1, 1]} : vector<10x16xf32> to vector<8x16xf32>
    %c30 = arith.constant 30 : index
    %528 = memref.load %arg4[%c30] : memref<144xf32, #tpu.memory_space<smem>>
    %529 = vector.broadcast %528 : f32 to vector<8x16xf32>
    %530 = arith.mulf %527, %529 : vector<8x16xf32>
    %531 = arith.addf %514, %530 : vector<8x16xf32>
    %c66 = arith.constant 66 : index
    %532 = memref.load %arg4[%c66] : memref<144xf32, #tpu.memory_space<smem>>
    %533 = vector.broadcast %532 : f32 to vector<8x16xf32>
    %534 = arith.mulf %527, %533 : vector<8x16xf32>
    %535 = arith.addf %518, %534 : vector<8x16xf32>
    %c102 = arith.constant 102 : index
    %536 = memref.load %arg4[%c102] : memref<144xf32, #tpu.memory_space<smem>>
    %537 = vector.broadcast %536 : f32 to vector<8x16xf32>
    %538 = arith.mulf %527, %537 : vector<8x16xf32>
    %539 = arith.addf %522, %538 : vector<8x16xf32>
    %c138 = arith.constant 138 : index
    %540 = memref.load %arg4[%c138] : memref<144xf32, #tpu.memory_space<smem>>
    %541 = vector.broadcast %540 : f32 to vector<8x16xf32>
    %542 = arith.mulf %527, %541 : vector<8x16xf32>
    %543 = arith.addf %526, %542 : vector<8x16xf32>
    %544 = vector.extract_strided_slice %509 {offsets = [2, 0], sizes = [8, 16], strides = [1, 1]} : vector<10x16xf32> to vector<8x16xf32>
    %c33 = arith.constant 33 : index
    %545 = memref.load %arg4[%c33] : memref<144xf32, #tpu.memory_space<smem>>
    %546 = vector.broadcast %545 : f32 to vector<8x16xf32>
    %547 = arith.mulf %544, %546 : vector<8x16xf32>
    %548 = arith.addf %531, %547 : vector<8x16xf32>
    %c69 = arith.constant 69 : index
    %549 = memref.load %arg4[%c69] : memref<144xf32, #tpu.memory_space<smem>>
    %550 = vector.broadcast %549 : f32 to vector<8x16xf32>
    %551 = arith.mulf %544, %550 : vector<8x16xf32>
    %552 = arith.addf %535, %551 : vector<8x16xf32>
    %c105 = arith.constant 105 : index
    %553 = memref.load %arg4[%c105] : memref<144xf32, #tpu.memory_space<smem>>
    %554 = vector.broadcast %553 : f32 to vector<8x16xf32>
    %555 = arith.mulf %544, %554 : vector<8x16xf32>
    %556 = arith.addf %539, %555 : vector<8x16xf32>
    %c141 = arith.constant 141 : index
    %557 = memref.load %arg4[%c141] : memref<144xf32, #tpu.memory_space<smem>>
    %558 = vector.broadcast %557 : f32 to vector<8x16xf32>
    %559 = arith.mulf %544, %558 : vector<8x16xf32>
    %560 = arith.addf %543, %559 : vector<8x16xf32>
    %561 = vector.extract_strided_slice %506 {offsets = [0, 0], sizes = [8, 16], strides = [1, 1]} : vector<10x16xf32> to vector<8x16xf32>
    %c28 = arith.constant 28 : index
    %562 = memref.load %arg4[%c28] : memref<144xf32, #tpu.memory_space<smem>>
    %563 = vector.broadcast %562 : f32 to vector<8x16xf32>
    %564 = arith.mulf %561, %563 : vector<8x16xf32>
    %565 = arith.addf %548, %564 : vector<8x16xf32>
    %c64 = arith.constant 64 : index
    %566 = memref.load %arg4[%c64] : memref<144xf32, #tpu.memory_space<smem>>
    %567 = vector.broadcast %566 : f32 to vector<8x16xf32>
    %568 = arith.mulf %561, %567 : vector<8x16xf32>
    %569 = arith.addf %552, %568 : vector<8x16xf32>
    %c100 = arith.constant 100 : index
    %570 = memref.load %arg4[%c100] : memref<144xf32, #tpu.memory_space<smem>>
    %571 = vector.broadcast %570 : f32 to vector<8x16xf32>
    %572 = arith.mulf %561, %571 : vector<8x16xf32>
    %573 = arith.addf %556, %572 : vector<8x16xf32>
    %c136 = arith.constant 136 : index
    %574 = memref.load %arg4[%c136] : memref<144xf32, #tpu.memory_space<smem>>
    %575 = vector.broadcast %574 : f32 to vector<8x16xf32>
    %576 = arith.mulf %561, %575 : vector<8x16xf32>
    %577 = arith.addf %560, %576 : vector<8x16xf32>
    %578 = vector.extract_strided_slice %506 {offsets = [1, 0], sizes = [8, 16], strides = [1, 1]} : vector<10x16xf32> to vector<8x16xf32>
    %c31 = arith.constant 31 : index
    %579 = memref.load %arg4[%c31] : memref<144xf32, #tpu.memory_space<smem>>
    %580 = vector.broadcast %579 : f32 to vector<8x16xf32>
    %581 = arith.mulf %578, %580 : vector<8x16xf32>
    %582 = arith.addf %565, %581 : vector<8x16xf32>
    %c67 = arith.constant 67 : index
    %583 = memref.load %arg4[%c67] : memref<144xf32, #tpu.memory_space<smem>>
    %584 = vector.broadcast %583 : f32 to vector<8x16xf32>
    %585 = arith.mulf %578, %584 : vector<8x16xf32>
    %586 = arith.addf %569, %585 : vector<8x16xf32>
    %c103 = arith.constant 103 : index
    %587 = memref.load %arg4[%c103] : memref<144xf32, #tpu.memory_space<smem>>
    %588 = vector.broadcast %587 : f32 to vector<8x16xf32>
    %589 = arith.mulf %578, %588 : vector<8x16xf32>
    %590 = arith.addf %573, %589 : vector<8x16xf32>
    %c139 = arith.constant 139 : index
    %591 = memref.load %arg4[%c139] : memref<144xf32, #tpu.memory_space<smem>>
    %592 = vector.broadcast %591 : f32 to vector<8x16xf32>
    %593 = arith.mulf %578, %592 : vector<8x16xf32>
    %594 = arith.addf %577, %593 : vector<8x16xf32>
    %595 = vector.extract_strided_slice %506 {offsets = [2, 0], sizes = [8, 16], strides = [1, 1]} : vector<10x16xf32> to vector<8x16xf32>
    %c34 = arith.constant 34 : index
    %596 = memref.load %arg4[%c34] : memref<144xf32, #tpu.memory_space<smem>>
    %597 = vector.broadcast %596 : f32 to vector<8x16xf32>
    %598 = arith.mulf %595, %597 : vector<8x16xf32>
    %599 = arith.addf %582, %598 : vector<8x16xf32>
    %c70 = arith.constant 70 : index
    %600 = memref.load %arg4[%c70] : memref<144xf32, #tpu.memory_space<smem>>
    %601 = vector.broadcast %600 : f32 to vector<8x16xf32>
    %602 = arith.mulf %595, %601 : vector<8x16xf32>
    %603 = arith.addf %586, %602 : vector<8x16xf32>
    %c106 = arith.constant 106 : index
    %604 = memref.load %arg4[%c106] : memref<144xf32, #tpu.memory_space<smem>>
    %605 = vector.broadcast %604 : f32 to vector<8x16xf32>
    %606 = arith.mulf %595, %605 : vector<8x16xf32>
    %607 = arith.addf %590, %606 : vector<8x16xf32>
    %c142 = arith.constant 142 : index
    %608 = memref.load %arg4[%c142] : memref<144xf32, #tpu.memory_space<smem>>
    %609 = vector.broadcast %608 : f32 to vector<8x16xf32>
    %610 = arith.mulf %595, %609 : vector<8x16xf32>
    %611 = arith.addf %594, %610 : vector<8x16xf32>
    %c15_i32_52 = arith.constant 15 : i32
    %612 = tpu.dynamic_rotate %506 by %c15_i32_52 dim 1 : vector<10x16xf32>, i32 -> vector<10x16xf32>
    %cst_53 = arith.constant 0.000000e+00 : f32
    %613 = vector.broadcast %cst_53 : f32 to vector<10x16xf32>
    %614 = arith.select %13, %612, %613 : vector<10x16xi1>, vector<10x16xf32>
    %615 = vector.extract_strided_slice %614 {offsets = [0, 0], sizes = [8, 16], strides = [1, 1]} : vector<10x16xf32> to vector<8x16xf32>
    %c29 = arith.constant 29 : index
    %616 = memref.load %arg4[%c29] : memref<144xf32, #tpu.memory_space<smem>>
    %617 = vector.broadcast %616 : f32 to vector<8x16xf32>
    %618 = arith.mulf %615, %617 : vector<8x16xf32>
    %619 = arith.addf %599, %618 : vector<8x16xf32>
    %c65 = arith.constant 65 : index
    %620 = memref.load %arg4[%c65] : memref<144xf32, #tpu.memory_space<smem>>
    %621 = vector.broadcast %620 : f32 to vector<8x16xf32>
    %622 = arith.mulf %615, %621 : vector<8x16xf32>
    %623 = arith.addf %603, %622 : vector<8x16xf32>
    %c101 = arith.constant 101 : index
    %624 = memref.load %arg4[%c101] : memref<144xf32, #tpu.memory_space<smem>>
    %625 = vector.broadcast %624 : f32 to vector<8x16xf32>
    %626 = arith.mulf %615, %625 : vector<8x16xf32>
    %627 = arith.addf %607, %626 : vector<8x16xf32>
    %c137 = arith.constant 137 : index
    %628 = memref.load %arg4[%c137] : memref<144xf32, #tpu.memory_space<smem>>
    %629 = vector.broadcast %628 : f32 to vector<8x16xf32>
    %630 = arith.mulf %615, %629 : vector<8x16xf32>
    %631 = arith.addf %611, %630 : vector<8x16xf32>
    %632 = vector.extract_strided_slice %614 {offsets = [1, 0], sizes = [8, 16], strides = [1, 1]} : vector<10x16xf32> to vector<8x16xf32>
    %c32 = arith.constant 32 : index
    %633 = memref.load %arg4[%c32] : memref<144xf32, #tpu.memory_space<smem>>
    %634 = vector.broadcast %633 : f32 to vector<8x16xf32>
    %635 = arith.mulf %632, %634 : vector<8x16xf32>
    %636 = arith.addf %619, %635 : vector<8x16xf32>
    %c68 = arith.constant 68 : index
    %637 = memref.load %arg4[%c68] : memref<144xf32, #tpu.memory_space<smem>>
    %638 = vector.broadcast %637 : f32 to vector<8x16xf32>
    %639 = arith.mulf %632, %638 : vector<8x16xf32>
    %640 = arith.addf %623, %639 : vector<8x16xf32>
    %c104 = arith.constant 104 : index
    %641 = memref.load %arg4[%c104] : memref<144xf32, #tpu.memory_space<smem>>
    %642 = vector.broadcast %641 : f32 to vector<8x16xf32>
    %643 = arith.mulf %632, %642 : vector<8x16xf32>
    %644 = arith.addf %627, %643 : vector<8x16xf32>
    %c140 = arith.constant 140 : index
    %645 = memref.load %arg4[%c140] : memref<144xf32, #tpu.memory_space<smem>>
    %646 = vector.broadcast %645 : f32 to vector<8x16xf32>
    %647 = arith.mulf %632, %646 : vector<8x16xf32>
    %648 = arith.addf %631, %647 : vector<8x16xf32>
    %649 = vector.extract_strided_slice %614 {offsets = [2, 0], sizes = [8, 16], strides = [1, 1]} : vector<10x16xf32> to vector<8x16xf32>
    %c35 = arith.constant 35 : index
    %650 = memref.load %arg4[%c35] : memref<144xf32, #tpu.memory_space<smem>>
    %651 = vector.broadcast %650 : f32 to vector<8x16xf32>
    %652 = arith.mulf %649, %651 : vector<8x16xf32>
    %653 = arith.addf %636, %652 : vector<8x16xf32>
    %c71 = arith.constant 71 : index
    %654 = memref.load %arg4[%c71] : memref<144xf32, #tpu.memory_space<smem>>
    %655 = vector.broadcast %654 : f32 to vector<8x16xf32>
    %656 = arith.mulf %649, %655 : vector<8x16xf32>
    %657 = arith.addf %640, %656 : vector<8x16xf32>
    %c107 = arith.constant 107 : index
    %658 = memref.load %arg4[%c107] : memref<144xf32, #tpu.memory_space<smem>>
    %659 = vector.broadcast %658 : f32 to vector<8x16xf32>
    %660 = arith.mulf %649, %659 : vector<8x16xf32>
    %661 = arith.addf %644, %660 : vector<8x16xf32>
    %c143 = arith.constant 143 : index
    %662 = memref.load %arg4[%c143] : memref<144xf32, #tpu.memory_space<smem>>
    %663 = vector.broadcast %662 : f32 to vector<8x16xf32>
    %664 = arith.mulf %649, %663 : vector<8x16xf32>
    %665 = arith.addf %648, %664 : vector<8x16xf32>
    %c0_54 = arith.constant 0 : index
    %c0_55 = arith.constant 0 : index
    %c0_56 = arith.constant 0 : index
    %c0_57 = arith.constant 0 : index
    %666 = vector.load %arg6[%c0_54, %c0_55, %c0_56, %c0_57] : memref<1x4x8x16xf32, #tpu.memory_space<vmem>>, vector<1x1x8x16xf32>
    %667 = vector.shape_cast %666 : vector<1x1x8x16xf32> to vector<8x16xf32>
    %668 = vector.shape_cast %653 : vector<8x16xf32> to vector<1x1x8x16xf32>
    tpu.vector_store %arg6[%c0_54, %c0_55, %c0_56, %c0_57], %668 {strides = array<i32>} : memref<1x4x8x16xf32, #tpu.memory_space<vmem>>, vector<1x1x8x16xf32>,
    %c0_58 = arith.constant 0 : index
    %c1_59 = arith.constant 1 : index
    %c0_60 = arith.constant 0 : index
    %c0_61 = arith.constant 0 : index
    %669 = vector.load %arg6[%c0_58, %c1_59, %c0_60, %c0_61] : memref<1x4x8x16xf32, #tpu.memory_space<vmem>>, vector<1x1x8x16xf32>
    %670 = vector.shape_cast %669 : vector<1x1x8x16xf32> to vector<8x16xf32>
    %671 = vector.shape_cast %657 : vector<8x16xf32> to vector<1x1x8x16xf32>
    tpu.vector_store %arg6[%c0_58, %c1_59, %c0_60, %c0_61], %671 {strides = array<i32>} : memref<1x4x8x16xf32, #tpu.memory_space<vmem>>, vector<1x1x8x16xf32>,
    %c0_62 = arith.constant 0 : index
    %c2_63 = arith.constant 2 : index
    %c0_64 = arith.constant 0 : index
    %c0_65 = arith.constant 0 : index
    %672 = vector.load %arg6[%c0_62, %c2_63, %c0_64, %c0_65] : memref<1x4x8x16xf32, #tpu.memory_space<vmem>>, vector<1x1x8x16xf32>
    %673 = vector.shape_cast %672 : vector<1x1x8x16xf32> to vector<8x16xf32>
    %674 = vector.shape_cast %661 : vector<8x16xf32> to vector<1x1x8x16xf32>
    tpu.vector_store %arg6[%c0_62, %c2_63, %c0_64, %c0_65], %674 {strides = array<i32>} : memref<1x4x8x16xf32, #tpu.memory_space<vmem>>, vector<1x1x8x16xf32>,
    %c0_66 = arith.constant 0 : index
    %c3_67 = arith.constant 3 : index
    %c0_68 = arith.constant 0 : index
    %c0_69 = arith.constant 0 : index
    %675 = vector.load %arg6[%c0_66, %c3_67, %c0_68, %c0_69] : memref<1x4x8x16xf32, #tpu.memory_space<vmem>>, vector<1x1x8x16xf32>
    %676 = vector.shape_cast %675 : vector<1x1x8x16xf32> to vector<8x16xf32>
    %677 = vector.shape_cast %665 : vector<8x16xf32> to vector<1x1x8x16xf32>
    tpu.vector_store %arg6[%c0_66, %c3_67, %c0_68, %c0_69], %677 {strides = array<i32>} : memref<1x4x8x16xf32, #tpu.memory_space<vmem>>, vector<1x1x8x16xf32>,
    return
  }
  func.func @transform_0(%arg0: i32, %arg1: i32) -> (i32, i32, i32, i32) {
    %c0_i32 = arith.constant 0 : i32
    %c0_i32_0 = arith.constant 0 : i32
    %c0_i32_1 = arith.constant 0 : i32
    return %arg0, %c0_i32, %arg1, %c0_i32_0 : i32, i32, i32, i32
  }
  func.func @transform_1(%arg0: i32, %arg1: i32) -> (i32, i32, i32, i32, i32) {
    %c0_i32 = arith.constant 0 : i32
    %c0_i32_0 = arith.constant 0 : i32
    %c0_i32_1 = arith.constant 0 : i32
    %c0_i32_2 = arith.constant 0 : i32
    return %arg0, %arg1, %c0_i32, %c0_i32_0, %c0_i32_1 : i32, i32, i32, i32, i32
  }
  func.func @transform_2(%arg0: i32, %arg1: i32) -> i32 {
    %c0_i32 = arith.constant 0 : i32
    %c0_i32_0 = arith.constant 0 : i32
    return %c0_i32 : i32
  }
  func.func @transform_3(%arg0: i32, %arg1: i32) -> i32 {
    %c0_i32 = arith.constant 0 : i32
    %c0_i32_0 = arith.constant 0 : i32
    return %c0_i32 : i32
  }
  func.func @transform_4(%arg0: i32, %arg1: i32) -> (i32, i32, i32, i32) {
    %c0_i32 = arith.constant 0 : i32
    %c0_i32_0 = arith.constant 0 : i32
    %c0_i32_1 = arith.constant 0 : i32
    return %arg0, %c0_i32, %arg1, %c0_i32_0 : i32, i32, i32, i32
  }
}

</mosaic_0001>

<llo_original>
// kernel: tpu_custom_call.1
$region0: #{tpu_custom_call.1}
  #allocation0 [shape = 'u32[]', space=smem, size = 0x4, offset = 0x4, fixed_abs, tag = 'smem constant byte address 0x4 - core index']
  #allocation1 [shape = 'u32[144,128]{1,0:T(1,128)}', space=vmem, size = 0x12000, scoped, tag = 'internal scratch']
  #allocation2 [shape = 'f32[4,10,16]{2,1,0:T(8,128)}', space=vmem, size = 0x8000, scoped, tag = 'scratch operand']
  %s0 = inlined_call_operand.hbm [shape: f32[2,4,16,16], index: 0, kind: input, shape index: {}]
  %s1 = inlined_call_operand.hbm [shape: f32[2,2,4,2,16], index: 1, kind: input, shape index: {}]
  %s2 = inlined_call_operand.vmem [shape: f32[144], index: 2, kind: input, shape index: {}]
  %s3 = inlined_call_operand.vmem [shape: f32[4], index: 3, kind: input, shape index: {}]
  %s4 = inlined_call_operand.hbm [shape: f32[2,4,16,16], index: 4, kind: output, shape index: {}]
  %s5 = sld [smem:[#allocation0]]
  $region65: #{tpu_custom_call.1} parent=0
    _
  %s7 = ssub.s32 1, %s5
  %s8 = scalar_select 0, %s7, %s5
  $region1: #{tpu_custom_call.1} parent=0
    #allocation3 [shape = 'u8[32768]{0}', space=vmem, size = 0x8000, scoped, tag = 'input window, operand 0']
    #allocation4 [shape = 's32[2]{0}', space=sflag, size = 0x8, scoped, tag = 'scoped memory for tpu_custom_call.1']
    #allocation5 [shape = 's32[2]{0}', space=sflag, size = 0x8, scoped, tag = 'scoped memory for tpu_custom_call.1']
    #allocation6 [shape = 's32[2]{0}', space=sflag, size = 0x8, scoped, tag = 'scoped memory for tpu_custom_call.1']
    #allocation7 [shape = 'u8[8192]{0}', space=vmem, size = 0x2000, scoped, tag = 'input window, operand 1']
    #allocation8 [shape = 's32[2]{0}', space=sflag, size = 0x8, scoped, tag = 'scoped memory for tpu_custom_call.1']
    #allocation9 [shape = 'u8[1024]{0}', space=smem, size = 0x400, scoped, tag = 'input window, operand 2, single buffered']
    #allocation10 [shape = 'u8[512]{0}', space=smem, size = 0x200, scoped, tag = 'input window, operand 3, single buffered']
    #allocation11 [shape = 's32[1]{0}', space=sflag, size = 0x4, scoped, tag = 'scoped memory for tpu_custom_call.1']
    #allocation12 [shape = 'u8[32768]{0}', space=vmem, size = 0x8000, scoped, tag = 'output window, operand 0']
    %9 = vsyncpa [#allocation4], 0
    %s10 = scalar_lea.sflag [#allocation4], 1
    %11 = vsyncpa %s10, 0
    %12 = vsyncpa [#allocation8], 0
    %s13 = scalar_lea.sflag [#allocation8], 1
    %14 = vsyncpa %s13, 0
    %15 = vsyncpa [#allocation6], 0
    %16 = vsyncpa [#allocation11], 0
    %17 = vsyncpa [#allocation5], 0
    %s18 = scalar_lea.sflag [#allocation5], 1
    %19 = vsyncpa %s18, 0
    loop: start=0, step=1, limit=6
    $region2: #{tpu_custom_call.1} parent=1 // loop_pre_header
      _
    $region3: #{tpu_custom_call.1} parent=1 // loop_header
      %s21 = sphi 0, %s25
      %p22 = scmp.ge.s32.totalorder %s21, 6
      %s28 = sphi 0, %s40
      %s29 = sphi 0, %s36
      %s30 = sphi 0, %s28
      %s31 = sphi 0, %s29
      %s32 = sphi 0, %s30
      %s33 = sphi 0, %s31
      %s45 = sphi 0, %s47
      %s48 = sphi 0, %s45
      %s49 = sphi 0, %s48
      %s65 = sphi 0, %s49
      %s73 = sphi 0, %s75
      %s76 = sphi 0, %s73
      %s77 = sphi 0, %s76
      %s93 = sphi 0, %s77
      %s97 = sphi 0, %s97
      %s99 = sphi 0, %s97
      %s100 = sphi 0, %s99
      %s114 = sphi 0, %s100
      %s118 = sphi 0, %s118
      %s120 = sphi 0, %s118
      %s121 = sphi 0, %s120
      %s135 = sphi 0, %s121
      %s143 = sphi 0, %s145
      %s146 = sphi 0, %s143
      %s147 = sphi 0, %s146
      %s163 = sphi 0, %s147
    $region4: #{tpu_custom_call.1} parent=1 // loop_header_branch
      %24 = sbr.rel (%p22) target = $region8
    $region5: #{tpu_custom_call.1} parent=1 // loop_body
      %s26 = ssub.s32 %s21, 1
      %s27 = ssub.s32 %s21, 2
      %s34 = sadd.s32 1, %s29
      %p35 = scmp.ge.s32.totalorder %s34, 2
      %s36 = scalar_select %p35, 0, %s34
      %s37 = sadd.s32 1, %s28
      %s38 = scalar_select %p35, %s37, %s28
      %p39 = scmp.ge.s32.totalorder %s38, 2
      %s40 = scalar_select %p39, 0, %s38
      %s41 = ssub.s32 %s28, %s40
      %s42 = ssub.s32 %s29, %s36
      %s43 = sor.u32 %s41, %s42
      %p44 = scmp.eq.s32.totalorder %s43, 0
      %s46 = sadd.s32 %s45, 1
      %s47 = scalar_select %p44, %s45, %s46
      %p50 = pneg %p44
      %p51 = scmp.eq.s32.totalorder %s21, 3
      %p52 = por %p50, %p51
      %p53 = scmp.ne.s32.totalorder %s45, %s48
      %p54 = scmp.eq.s32.totalorder %s21, 0
      %p55 = por %p53, %p54
      %p56 = scmp.ne.s32.totalorder %s45, %s48
      %p57 = scmp.eq.s32.totalorder %s26, 3
      %p58 = por %p56, %p57
      %p59 = scmp.ne.s32.totalorder %s48, %s49
      %p60 = scmp.eq.s32.totalorder %s26, 0
      %p61 = por %p59, %p60
      %p62 = scmp.ne.s32.totalorder %s48, %s49
      %p63 = scmp.eq.s32.totalorder %s27, 3
      %p64 = por %p62, %p63
      %p66 = scmp.ne.s32.totalorder %s49, %s65
      %p67 = scmp.eq.s32.totalorder %s27, 0
      %p68 = por %p66, %p67
      %s69 = ssub.s32 %s28, %s40
      %s70 = ssub.s32 %s29, %s36
      %s71 = sor.u32 %s69, %s70
      %p72 = scmp.eq.s32.totalorder %s71, 0
      %s74 = sadd.s32 %s73, 1
      %s75 = scalar_select %p72, %s73, %s74
      %p78 = pneg %p72
      %p79 = scmp.eq.s32.totalorder %s21, 3
      %p80 = por %p78, %p79
      %p81 = scmp.ne.s32.totalorder %s73, %s76
      %p82 = scmp.eq.s32.totalorder %s21, 0
      %p83 = por %p81, %p82
      %p84 = scmp.ne.s32.totalorder %s73, %s76
      %p85 = scmp.eq.s32.totalorder %s26, 3
      %p86 = por %p84, %p85
      %p87 = scmp.ne.s32.totalorder %s76, %s77
      %p88 = scmp.eq.s32.totalorder %s26, 0
      %p89 = por %p87, %p88
      %p90 = scmp.ne.s32.totalorder %s76, %s77
      %p91 = scmp.eq.s32.totalorder %s27, 3
      %p92 = por %p90, %p91
      %p94 = scmp.ne.s32.totalorder %s77, %s93
      %p95 = scmp.eq.s32.totalorder %s27, 0
      %p96 = por %p94, %p95
      %s98 = sadd.s32 %s97, 1
      %p101 = scmp.eq.s32.totalorder %s21, 3
      %p102 = scmp.ne.s32.totalorder %s97, %s99
      %p103 = scmp.eq.s32.totalorder %s21, 0
      %p104 = por %p102, %p103
      %p105 = scmp.ne.s32.totalorder %s97, %s99
      %p106 = scmp.eq.s32.totalorder %s26, 3
      %p107 = por %p105, %p106
      %p108 = scmp.ne.s32.totalorder %s99, %s100
      %p109 = scmp.eq.s32.totalorder %s26, 0
      %p110 = por %p108, %p109
      %p111 = scmp.ne.s32.totalorder %s99, %s100
      %p112 = scmp.eq.s32.totalorder %s27, 3
      %p113 = por %p111, %p112
      %p115 = scmp.ne.s32.totalorder %s100, %s114
      %p116 = scmp.eq.s32.totalorder %s27, 0
      %p117 = por %p115, %p116
      %s119 = sadd.s32 %s118, 1
      %p122 = scmp.eq.s32.totalorder %s21, 3
      %p123 = scmp.ne.s32.totalorder %s118, %s120
      %p124 = scmp.eq.s32.totalorder %s21, 0
      %p125 = por %p123, %p124
      %p126 = scmp.ne.s32.totalorder %s118, %s120
      %p127 = scmp.eq.s32.totalorder %s26, 3
      %p128 = por %p126, %p127
      %p129 = scmp.ne.s32.totalorder %s120, %s121
      %p130 = scmp.eq.s32.totalorder %s26, 0
      %p131 = por %p129, %p130
      %p132 = scmp.ne.s32.totalorder %s120, %s121
      %p133 = scmp.eq.s32.totalorder %s27, 3
      %p134 = por %p132, %p133
      %p136 = scmp.ne.s32.totalorder %s121, %s135
      %p137 = scmp.eq.s32.totalorder %s27, 0
      %p138 = por %p136, %p137
      %s139 = ssub.s32 %s28, %s40
      %s140 = ssub.s32 %s29, %s36
      %s141 = sor.u32 %s139, %s140
      %p142 = scmp.eq.s32.totalorder %s141, 0
      %s144 = sadd.s32 %s143, 1
      %s145 = scalar_select %p142, %s143, %s144
      %p148 = pneg %p142
      %p149 = scmp.eq.s32.totalorder %s21, 3
      %p150 = por %p148, %p149
      %p151 = scmp.ne.s32.totalorder %s143, %s146
      %p152 = scmp.eq.s32.totalorder %s21, 0
      %p153 = por %p151, %p152
      %p154 = scmp.ne.s32.totalorder %s143, %s146
      %p155 = scmp.eq.s32.totalorder %s26, 3
      %p156 = por %p154, %p155
      %p157 = scmp.ne.s32.totalorder %s146, %s147
      %p158 = scmp.eq.s32.totalorder %s26, 0
      %p159 = por %p157, %p158
      %p160 = scmp.ne.s32.totalorder %s146, %s147
      %p161 = scmp.eq.s32.totalorder %s27, 3
      %p162 = por %p160, %p161
      %p164 = scmp.ne.s32.totalorder %s147, %s163
      %p165 = scmp.eq.s32.totalorder %s27, 0
      %p166 = por %p164, %p165
      %p167 = scmp.le.s32.totalorder 1, %s21
      %p168 = scmp.lt.s32.totalorder %s21, 5
      %p169 = pnand %p167, %p168
      %p170 = pneg %p169
      // Predicated region
      $region9: #{tpu_custom_call.1} parent=5 // pred_check
        _
      $region10: #{tpu_custom_call.1} parent=5 // pred_check_branch
        %172 = sbr.rel (%p169) target = $region12
      $region11: #{tpu_custom_call.1} parent=5 // pred_region
        %s173 = ssub.s32 %s21, 1
        // Predicated region
        $region13: #{tpu_custom_call.1} parent=11 // pred_check
          %p174 = pneg %p110
        $region14: #{tpu_custom_call.1} parent=11 // pred_check_branch
          %176 = sbr.rel (%p174) target = $region16
        $region15: #{tpu_custom_call.1} parent=11 // pred_region
          %s178 = ssub.s32 32, 32
          %179 = vsyncadd [#allocation6], %s178
          %s181 = sshll.u32 %s2, 4
          %s182 = int_to_ptr.vmem [resolvable:$true] %s181
          %184 = dma.vmem_to_smem %s182, 32, [#allocation9], [#allocation6]
        $region16: #{tpu_custom_call.1} parent=11 // pred_fallthru
          _
        // Predicated region
        $region17: #{tpu_custom_call.1} parent=11 // pred_check
          %p185 = pneg %p131
        $region18: #{tpu_custom_call.1} parent=11 // pred_check_branch
          %187 = sbr.rel (%p185) target = $region20
        $region19: #{tpu_custom_call.1} parent=11 // pred_region
          %s189 = ssub.s32 16, 16
          %190 = vsyncadd [#allocation11], %s189
          %s192 = sshll.u32 %s3, 4
          %s193 = int_to_ptr.vmem [resolvable:$true] %s192
          %195 = dma.vmem_to_smem %s193, 16, [#allocation10], [#allocation11]
        $region20: #{tpu_custom_call.1} parent=11 // pred_fallthru
          _
      $region12: #{tpu_custom_call.1} parent=5 // pred_fallthru
        _
      %p196 = scmp.lt.s32.totalorder %s21, 4
      // Predicated region
      $region21: #{tpu_custom_call.1} parent=5 // pred_check
        %p197 = pneg %p196
      $region22: #{tpu_custom_call.1} parent=5 // pred_check_branch
        %199 = sbr.rel (%p197) target = $region24
      $region23: #{tpu_custom_call.1} parent=5 // pred_region
        // Predicated region
        $region25: #{tpu_custom_call.1} parent=23 // pred_check
          %p200 = pneg %p55
        $region26: #{tpu_custom_call.1} parent=23 // pred_check_branch
          %202 = sbr.rel (%p200) target = $region28
        $region27: #{tpu_custom_call.1} parent=23 // pred_region
          %s203 = sand.u32 %s45, 1
          %s204 = scalar_lea.sflag [#allocation4], %s203
          %s205 = sand.u32 %s45, 1
          %s206 = smul.addr %s205, 32
          %s207 = scalar_lea.vmem [#allocation3], %s206
          %s209 = ssub.s32 512, 512
          %210 = vsyncadd %s204, %s209
          %s211 = smul.addr %s28, 8
          %s212 = sadd.s32 %s29, %s211
          %s213 = smul.addr %s212, 128
          %s214 = scalar_lea.hbm %s0, %s213
          %s215 = sshll.u32 %s207, 4
          %s216 = int_to_ptr.vmem [resolvable:$true] %s215
          %221 = dma.hbm_to_vmem [thread:$0]  %s214, 512, %s216, %s204, 256, 128, 8
        $region28: #{tpu_custom_call.1} parent=23 // pred_fallthru
          _
        // Predicated region
        $region29: #{tpu_custom_call.1} parent=23 // pred_check
          %p222 = pneg %p83
        $region30: #{tpu_custom_call.1} parent=23 // pred_check_branch
          %224 = sbr.rel (%p222) target = $region32
        $region31: #{tpu_custom_call.1} parent=23 // pred_region
          %s225 = sand.u32 %s73, 1
          %s226 = scalar_lea.sflag [#allocation8], %s225
          %s227 = sand.u32 %s73, 1
          %s228 = smul.addr %s227, 8
          %s229 = scalar_lea.vmem [#allocation7], %s228
          %s231 = ssub.s32 128, 128
          %232 = vsyncadd %s226, %s231
          %s233 = smul.addr %s29, 4
          %s234 = smul.addr %s28, 8
          %s235 = sadd.s32 %s233, %s234
          %s236 = smul.addr %s235, 32
          %s237 = scalar_lea.hbm %s1, %s236
          %s238 = sshll.u32 %s229, 4
          %s239 = int_to_ptr.vmem [resolvable:$true] %s238
          %244 = dma.hbm_to_vmem [thread:$0]  %s237, 128, %s239, %s226, 32, 32, 2
        $region32: #{tpu_custom_call.1} parent=23 // pred_fallthru
          _
      $region24: #{tpu_custom_call.1} parent=5 // pred_fallthru
        _
      %p245 = scmp.le.s32.totalorder 1, %s21
      %p246 = scmp.lt.s32.totalorder %s21, 5
      %p247 = pnand %p245, %p246
      %p248 = pneg %p247
      // Predicated region
      $region33: #{tpu_custom_call.1} parent=5 // pred_check
        _
      $region34: #{tpu_custom_call.1} parent=5 // pred_check_branch
        %250 = sbr.rel (%p247) target = $region36
      $region35: #{tpu_custom_call.1} parent=5 // pred_region
        %s251 = ssub.s32 %s21, 1
        %s252 = sand.u32 %s48, 1
        %s253 = scalar_lea.sflag [#allocation4], %s252
        %s254 = sand.u32 %s48, 1
        %s255 = smul.addr %s254, 32
        %s256 = scalar_lea.vmem [#allocation3], %s255
        // Predicated region
        $region37: #{tpu_custom_call.1} parent=35 // pred_check
          %p257 = pneg %p61
        $region38: #{tpu_custom_call.1} parent=35 // pred_check_branch
          %259 = sbr.rel (%p257) target = $region40
        $region39: #{tpu_custom_call.1} parent=35 // pred_region
          %260 = dma.done %s253, 512
        $region40: #{tpu_custom_call.1} parent=35 // pred_fallthru
          _
        %s261 = sand.u32 %s76, 1
        %s262 = scalar_lea.sflag [#allocation8], %s261
        %s263 = sand.u32 %s76, 1
        %s264 = smul.addr %s263, 8
        %s265 = scalar_lea.vmem [#allocation7], %s264
        // Predicated region
        $region41: #{tpu_custom_call.1} parent=35 // pred_check
          %p266 = pneg %p89
        $region42: #{tpu_custom_call.1} parent=35 // pred_check_branch
          %268 = sbr.rel (%p266) target = $region44
        $region43: #{tpu_custom_call.1} parent=35 // pred_region
          %269 = dma.done %s262, 128
        $region44: #{tpu_custom_call.1} parent=35 // pred_fallthru
          _
        // Predicated region
        $region45: #{tpu_custom_call.1} parent=35 // pred_check
          %p270 = pneg %p110
        $region46: #{tpu_custom_call.1} parent=35 // pred_check_branch
          %272 = sbr.rel (%p270) target = $region48
        $region47: #{tpu_custom_call.1} parent=35 // pred_region
          %273 = dma.done [#allocation6], 32
        $region48: #{tpu_custom_call.1} parent=35 // pred_fallthru
          _
        // Predicated region
        $region49: #{tpu_custom_call.1} parent=35 // pred_check
          %p274 = pneg %p131
        $region50: #{tpu_custom_call.1} parent=35 // pred_check_branch
          %276 = sbr.rel (%p274) target = $region52
        $region51: #{tpu_custom_call.1} parent=35 // pred_region
          %277 = dma.done [#allocation11], 16
        $region52: #{tpu_custom_call.1} parent=35 // pred_fallthru
          _
        %278 = sfence
        %s279 = sand.u32 %s48, 1
        %s280 = scalar_lea.sflag [#allocation4], %s279
        %s281 = sand.u32 %s48, 1
        %s282 = smul.addr %s281, 32
        %s283 = scalar_lea.vmem [#allocation3], %s282
        %p284 = pneg %p61
        %p285 = pneg %p58
        %s286 = sand.u32 %s76, 1
        %s287 = scalar_lea.sflag [#allocation8], %s286
        %s288 = sand.u32 %s76, 1
        %s289 = smul.addr %s288, 8
        %s290 = scalar_lea.vmem [#allocation7], %s289
        %p291 = pneg %p89
        %p292 = pneg %p86
        %p293 = pneg %p110
        %p294 = pneg %p107
        %p295 = pneg %p131
        %p296 = pneg %p128
        %p297 = pneg %p159
        %p298 = pneg %p156
        %s299 = sand.u32 %s146, 1
        %s300 = scalar_lea.sflag [#allocation5], %s299
        %s301 = sand.u32 %s146, 1
        %s302 = smul.addr %s301, 32
        %s303 = scalar_lea.vmem [#allocation12], %s302
        %v304 = vld [vmem:[%s256] sm:$0xff]
        %v305 = vld [vmem:[%s256 + $0x8] sm:$0xff]
        %v306 = vld [vmem:[%s256 + $0x10] sm:$0xff]
        %v307 = vld [vmem:[%s256 + $0x18] sm:$0xff]
        %vm308 = vcmask 130048
        %309 = vst.msk [vmem:[#allocation2 + $0x1] sm:$0xff] %vm308, %v304
        %310 = vst.msk [vmem:[#allocation2 + $0x11] sm:$0xff] %vm308, %v305
        %311 = vst.msk [vmem:[#allocation2 + $0x21] sm:$0xff] %vm308, %v306
        %312 = vst.msk [vmem:[#allocation2 + $0x31] sm:$0xff] %vm308, %v307
        %v313 = vld [vmem:[%s265] sm:$0x1]
        %v314 = vld [vmem:[%s265 + $0x2] sm:$0x1]
        %v315 = vld [vmem:[%s265 + $0x4] sm:$0x1]
        %v316 = vld [vmem:[%s265 + $0x6] sm:$0x1]
        %vm317 = vcmask 122880
        %318 = vst.msk [vmem:[#allocation2] sm:$0x1] %vm317, %v313
        %319 = vst.msk [vmem:[#allocation2 + $0x10] sm:$0x1] %vm317, %v314
        %320 = vst.msk [vmem:[#allocation2 + $0x20] sm:$0x1] %vm317, %v315
        %321 = vst.msk [vmem:[#allocation2 + $0x30] sm:$0x1] %vm317, %v316
        %v322 = vld [vmem:[%s265 + $0x1] sm:$0x1]
        %v323 = vld [vmem:[%s265 + $0x3] sm:$0x1]
        %v324 = vld [vmem:[%s265 + $0x5] sm:$0x1]
        %v325 = vld [vmem:[%s265 + $0x7] sm:$0x1]
        %326 = vst.msk [vmem:[#allocation2 + $0x9] sm:$0x1] %vm317, %v322
        %327 = vst.msk [vmem:[#allocation2 + $0x19] sm:$0x1] %vm317, %v323
        %328 = vst.msk [vmem:[#allocation2 + $0x29] sm:$0x1] %vm317, %v324
        %329 = vst.msk [vmem:[#allocation2 + $0x39] sm:$0x1] %vm317, %v325
        %v330 = vlaneseq
        %v331 = vand.u32 %v330, 127
        %vm332 = vcmp.ge.s32.totalorder %v331, 1
        %vm333 = vcmp.lt.s32.totalorder %v331, 15
        %s334 = sld [smem:[#allocation10]]
        %v335 = vstv %s334
        %s336 = sld [smem:[#allocation10 + $0x1]]
        %v337 = vstv %s336
        %s338 = sld [smem:[#allocation10 + $0x2]]
        %v339 = vstv %s338
        %s340 = sld [smem:[#allocation10 + $0x3]]
        %v341 = vstv %s340
        %v342 = vld [vmem:[#allocation2] sm:$0xff]
        %v343 = vld [vmem:[#allocation2 + $0x8] sm:$0x3]
        %vm344 = vcmask 1047680
        %345 = vrot.lane.b32.xlu0 %v342, 16
        %v346 = vpop.permute.xlu0 %345
        %v347 = vsel %vm344, %v346, %v342
        %348 = vrot.lane.b32.xlu0 %v343, 16
        %v349 = vpop.permute.xlu0 %348
        %v350 = vsel %vm344, %v349, %v343
        %351 = vrot.lane.b32.xlu0 %v347, 16
        %v352 = vpop.permute.xlu0 %351
        %353 = vrot.lane.b32.xlu0 %v350, 16
        %v354 = vpop.permute.xlu0 %353
        %v355 = vsel %vm344, %v352, %v342
        %v356 = vsel %vm344, %v354, %v343
        %359 = vrot.lane.b32.xlu0 %v355, 113
        %v360 = vpop.permute.xlu0 %359
        %361 = vrot.lane.b32.xlu0 %v356, 113
        %v362 = vpop.permute.xlu0 %361
        %v365 = vsel %vm332, %v360, 0.0
        %v366 = vsel %vm332, %v362, 0.0
        %s367 = sld [smem:[#allocation9]]
        %v368 = vstv %s367
        %v369 = vmul.f32 %v365, %v368
        %v370 = vadd.f32 %v335, %v369
        %s371 = sld [smem:[#allocation9 + $0x24]]
        %v372 = vstv %s371
        %v373 = vmul.f32 %v365, %v372
        %v374 = vadd.f32 %v337, %v373
        %s375 = sld [smem:[#allocation9 + $0x48]]
        %v376 = vstv %s375
        %v377 = vmul.f32 %v365, %v376
        %v378 = vadd.f32 %v339, %v377
        %s379 = sld [smem:[#allocation9 + $0x6c]]
        %v380 = vstv %s379
        %v381 = vmul.f32 %v365, %v380
        %v382 = vadd.f32 %v341, %v381
        %s383 = sld [smem:[#allocation9 + $0x3]]
        %v384 = vstv %s383
        %v385 = vmul.f32 %v365, %v384
        %v386 = vmul.f32 %v366, %v384
        %vm389 = vcmask 1046528
        %v390 = vrot.slane %v385, 1
        %v391 = vrot.slane %v386, 1
        %v392 = vsel %vm389, %v390, %v391
        %v394 = vadd.f32 %v370, %v392
        %s395 = sld [smem:[#allocation9 + $0x27]]
        %v396 = vstv %s395
        %v397 = vmul.f32 %v365, %v396
        %v398 = vmul.f32 %v366, %v396
        %v401 = vrot.slane %v397, 1
        %v402 = vrot.slane %v398, 1
        %v403 = vsel %vm389, %v401, %v402
        %v405 = vadd.f32 %v374, %v403
        %s406 = sld [smem:[#allocation9 + $0x4b]]
        %v407 = vstv %s406
        %v408 = vmul.f32 %v365, %v407
        %v409 = vmul.f32 %v366, %v407
        %v412 = vrot.slane %v408, 1
        %v413 = vrot.slane %v409, 1
        %v414 = vsel %vm389, %v412, %v413
        %v416 = vadd.f32 %v378, %v414
        %s417 = sld [smem:[#allocation9 + $0x6f]]
        %v418 = vstv %s417
        %v419 = vmul.f32 %v365, %v418
        %v420 = vmul.f32 %v366, %v418
        %v423 = vrot.slane %v419, 1
        %v424 = vrot.slane %v420, 1
        %v425 = vsel %vm389, %v423, %v424
        %v427 = vadd.f32 %v382, %v425
        %s428 = sld [smem:[#allocation9 + $0x6]]
        %v429 = vstv %s428
        %v430 = vmul.f32 %v365, %v429
        %v431 = vmul.f32 %v366, %v429
        %vm434 = vcmask 1045504
        %v435 = vrot.slane %v430, 2
        %v436 = vrot.slane %v431, 2
        %v437 = vsel %vm434, %v435, %v436
        %v439 = vadd.f32 %v394, %v437
        %s440 = sld [smem:[#allocation9 + $0x2a]]
        %v441 = vstv %s440
        %v442 = vmul.f32 %v365, %v441
        %v443 = vmul.f32 %v366, %v441
        %v446 = vrot.slane %v442, 2
        %v447 = vrot.slane %v443, 2
        %v448 = vsel %vm434, %v446, %v447
        %v450 = vadd.f32 %v405, %v448
        %s451 = sld [smem:[#allocation9 + $0x4e]]
        %v452 = vstv %s451
        %v453 = vmul.f32 %v365, %v452
        %v454 = vmul.f32 %v366, %v452
        %v457 = vrot.slane %v453, 2
        %v458 = vrot.slane %v454, 2
        %v459 = vsel %vm434, %v457, %v458
        %v461 = vadd.f32 %v416, %v459
        %s462 = sld [smem:[#allocation9 + $0x72]]
        %v463 = vstv %s462
        %v464 = vmul.f32 %v365, %v463
        %v465 = vmul.f32 %v366, %v463
        %v468 = vrot.slane %v464, 2
        %v469 = vrot.slane %v465, 2
        %v470 = vsel %vm434, %v468, %v469
        %v472 = vadd.f32 %v427, %v470
        %s473 = sld [smem:[#allocation9 + $0x1]]
        %v474 = vstv %s473
        %v475 = vmul.f32 %v342, %v474
        %v476 = vadd.f32 %v439, %v475
        %s477 = sld [smem:[#allocation9 + $0x25]]
        %v478 = vstv %s477
        %v479 = vmul.f32 %v342, %v478
        %v480 = vadd.f32 %v450, %v479
        %s481 = sld [smem:[#allocation9 + $0x49]]
        %v482 = vstv %s481
        %v483 = vmul.f32 %v342, %v482
        %v484 = vadd.f32 %v461, %v483
        %s485 = sld [smem:[#allocation9 + $0x6d]]
        %v486 = vstv %s485
        %v487 = vmul.f32 %v342, %v486
        %v488 = vadd.f32 %v472, %v487
        %s489 = sld [smem:[#allocation9 + $0x4]]
        %v490 = vstv %s489
        %v491 = vmul.f32 %v342, %v490
        %v492 = vmul.f32 %v343, %v490
        %v495 = vrot.slane %v491, 1
        %v496 = vrot.slane %v492, 1
        %v497 = vsel %vm389, %v495, %v496
        %v499 = vadd.f32 %v476, %v497
        %s500 = sld [smem:[#allocation9 + $0x28]]
        %v501 = vstv %s500
        %v502 = vmul.f32 %v342, %v501
        %v503 = vmul.f32 %v343, %v501
        %v506 = vrot.slane %v502, 1
        %v507 = vrot.slane %v503, 1
        %v508 = vsel %vm389, %v506, %v507
        %v510 = vadd.f32 %v480, %v508
        %s511 = sld [smem:[#allocation9 + $0x4c]]
        %v512 = vstv %s511
        %v513 = vmul.f32 %v342, %v512
        %v514 = vmul.f32 %v343, %v512
        %v517 = vrot.slane %v513, 1
        %v518 = vrot.slane %v514, 1
        %v519 = vsel %vm389, %v517, %v518
        %v521 = vadd.f32 %v484, %v519
        %s522 = sld [smem:[#allocation9 + $0x70]]
        %v523 = vstv %s522
        %v524 = vmul.f32 %v342, %v523
        %v525 = vmul.f32 %v343, %v523
        %v528 = vrot.slane %v524, 1
        %v529 = vrot.slane %v525, 1
        %v530 = vsel %vm389, %v528, %v529
        %v532 = vadd.f32 %v488, %v530
        %s533 = sld [smem:[#allocation9 + $0x7]]
        %v534 = vstv %s533
        %v535 = vmul.f32 %v342, %v534
        %v536 = vmul.f32 %v343, %v534
        %v539 = vrot.slane %v535, 2
        %v540 = vrot.slane %v536, 2
        %v541 = vsel %vm434, %v539, %v540
        %v543 = vadd.f32 %v499, %v541
        %s544 = sld [smem:[#allocation9 + $0x2b]]
        %v545 = vstv %s544
        %v546 = vmul.f32 %v342, %v545
        %v547 = vmul.f32 %v343, %v545
        %v550 = vrot.slane %v546, 2
        %v551 = vrot.slane %v547, 2
        %v552 = vsel %vm434, %v550, %v551
        %v554 = vadd.f32 %v510, %v552
        %s555 = sld [smem:[#allocation9 + $0x4f]]
        %v556 = vstv %s555
        %v557 = vmul.f32 %v342, %v556
        %v558 = vmul.f32 %v343, %v556
        %v561 = vrot.slane %v557, 2
        %v562 = vrot.slane %v558, 2
        %v563 = vsel %vm434, %v561, %v562
        %v565 = vadd.f32 %v521, %v563
        %s566 = sld [smem:[#allocation9 + $0x73]]
        %v567 = vstv %s566
        %v568 = vmul.f32 %v342, %v567
        %v569 = vmul.f32 %v343, %v567
        %v572 = vrot.slane %v568, 2
        %v573 = vrot.slane %v569, 2
        %v574 = vsel %vm434, %v572, %v573
        %v576 = vadd.f32 %v532, %v574
        %577 = vrot.lane.b32.xlu0 %v355, 127
        %v578 = vpop.permute.xlu0 %577
        %579 = vrot.lane.b32.xlu0 %v356, 127
        %v580 = vpop.permute.xlu0 %579
        %v583 = vsel %vm333, %v578, 0.0
        %v584 = vsel %vm333, %v580, 0.0
        %s585 = sld [smem:[#allocation9 + $0x2]]
        %v586 = vstv %s585
        %v587 = vmul.f32 %v583, %v586
        %v588 = vadd.f32 %v543, %v587
        %s589 = sld [smem:[#allocation9 + $0x26]]
        %v590 = vstv %s589
        %v591 = vmul.f32 %v583, %v590
        %v592 = vadd.f32 %v554, %v591
        %s593 = sld [smem:[#allocation9 + $0x4a]]
        %v594 = vstv %s593
        %v595 = vmul.f32 %v583, %v594
        %v596 = vadd.f32 %v565, %v595
        %s597 = sld [smem:[#allocation9 + $0x6e]]
        %v598 = vstv %s597
        %v599 = vmul.f32 %v583, %v598
        %v600 = vadd.f32 %v576, %v599
        %s601 = sld [smem:[#allocation9 + $0x5]]
        %v602 = vstv %s601
        %v603 = vmul.f32 %v583, %v602
        %v604 = vmul.f32 %v584, %v602
        %v607 = vrot.slane %v603, 1
        %v608 = vrot.slane %v604, 1
        %v609 = vsel %vm389, %v607, %v608
        %v611 = vadd.f32 %v588, %v609
        %s612 = sld [smem:[#allocation9 + $0x29]]
        %v613 = vstv %s612
        %v614 = vmul.f32 %v583, %v613
        %v615 = vmul.f32 %v584, %v613
        %v618 = vrot.slane %v614, 1
        %v619 = vrot.slane %v615, 1
        %v620 = vsel %vm389, %v618, %v619
        %v622 = vadd.f32 %v592, %v620
        %s623 = sld [smem:[#allocation9 + $0x4d]]
        %v624 = vstv %s623
        %v625 = vmul.f32 %v583, %v624
        %v626 = vmul.f32 %v584, %v624
        %v629 = vrot.slane %v625, 1
        %v630 = vrot.slane %v626, 1
        %v631 = vsel %vm389, %v629, %v630
        %v633 = vadd.f32 %v596, %v631
        %s634 = sld [smem:[#allocation9 + $0x71]]
        %v635 = vstv %s634
        %v636 = vmul.f32 %v583, %v635
        %v637 = vmul.f32 %v584, %v635
        %v640 = vrot.slane %v636, 1
        %v641 = vrot.slane %v637, 1
        %v642 = vsel %vm389, %v640, %v641
        %v644 = vadd.f32 %v600, %v642
        %s645 = sld [smem:[#allocation9 + $0x8]]
        %v646 = vstv %s645
        %v647 = vmul.f32 %v583, %v646
        %v648 = vmul.f32 %v584, %v646
        %v651 = vrot.slane %v647, 2
        %v652 = vrot.slane %v648, 2
        %v653 = vsel %vm434, %v651, %v652
        %v655 = vadd.f32 %v611, %v653
        %s656 = sld [smem:[#allocation9 + $0x2c]]
        %v657 = vstv %s656
        %v658 = vmul.f32 %v583, %v657
        %v659 = vmul.f32 %v584, %v657
        %v662 = vrot.slane %v658, 2
        %v663 = vrot.slane %v659, 2
        %v664 = vsel %vm434, %v662, %v663
        %v666 = vadd.f32 %v622, %v664
        %s667 = sld [smem:[#allocation9 + $0x50]]
        %v668 = vstv %s667
        %v669 = vmul.f32 %v583, %v668
        %v670 = vmul.f32 %v584, %v668
        %v673 = vrot.slane %v669, 2
        %v674 = vrot.slane %v670, 2
        %v675 = vsel %vm434, %v673, %v674
        %v677 = vadd.f32 %v633, %v675
        %s678 = sld [smem:[#allocation9 + $0x74]]
        %v679 = vstv %s678
        %v680 = vmul.f32 %v583, %v679
        %v681 = vmul.f32 %v584, %v679
        %v684 = vrot.slane %v680, 2
        %v685 = vrot.slane %v681, 2
        %v686 = vsel %vm434, %v684, %v685
        %v688 = vadd.f32 %v644, %v686
        %s689 = scalar_lea.vmem [#allocation2], 16
        %v690 = vld [vmem:[%s689] sm:$0xff]
        %v691 = vld [vmem:[%s689 + $0x8] sm:$0x3]
        %692 = vrot.lane.b32.xlu0 %v690, 16
        %v693 = vpop.permute.xlu0 %692
        %v694 = vsel %vm344, %v693, %v690
        %695 = vrot.lane.b32.xlu0 %v691, 16
        %v696 = vpop.permute.xlu0 %695
        %v697 = vsel %vm344, %v696, %v691
        %698 = vrot.lane.b32.xlu0 %v694, 16
        %v699 = vpop.permute.xlu0 %698
        %700 = vrot.lane.b32.xlu0 %v697, 16
        %v701 = vpop.permute.xlu0 %700
        %v702 = vsel %vm344, %v699, %v690
        %v703 = vsel %vm344, %v701, %v691
        %706 = vrot.lane.b32.xlu0 %v702, 113
        %v707 = vpop.permute.xlu0 %706
        %708 = vrot.lane.b32.xlu0 %v703, 113
        %v709 = vpop.permute.xlu0 %708
        %v712 = vsel %vm332, %v707, 0.0
        %v713 = vsel %vm332, %v709, 0.0
        %s714 = sld [smem:[#allocation9 + $0x9]]
        %v715 = vstv %s714
        %v716 = vmul.f32 %v712, %v715
        %v717 = vadd.f32 %v655, %v716
        %s718 = sld [smem:[#allocation9 + $0x2d]]
        %v719 = vstv %s718
        %v720 = vmul.f32 %v712, %v719
        %v721 = vadd.f32 %v666, %v720
        %s722 = sld [smem:[#allocation9 + $0x51]]
        %v723 = vstv %s722
        %v724 = vmul.f32 %v712, %v723
        %v725 = vadd.f32 %v677, %v724
        %s726 = sld [smem:[#allocation9 + $0x75]]
        %v727 = vstv %s726
        %v728 = vmul.f32 %v712, %v727
        %v729 = vadd.f32 %v688, %v728
        %s730 = sld [smem:[#allocation9 + $0xc]]
        %v731 = vstv %s730
        %v732 = vmul.f32 %v712, %v731
        %v733 = vmul.f32 %v713, %v731
        %v736 = vrot.slane %v732, 1
        %v737 = vrot.slane %v733, 1
        %v738 = vsel %vm389, %v736, %v737
        %v740 = vadd.f32 %v717, %v738
        %s741 = sld [smem:[#allocation9 + $0x30]]
        %v742 = vstv %s741
        %v743 = vmul.f32 %v712, %v742
        %v744 = vmul.f32 %v713, %v742
        %v747 = vrot.slane %v743, 1
        %v748 = vrot.slane %v744, 1
        %v749 = vsel %vm389, %v747, %v748
        %v751 = vadd.f32 %v721, %v749
        %s752 = sld [smem:[#allocation9 + $0x54]]
        %v753 = vstv %s752
        %v754 = vmul.f32 %v712, %v753
        %v755 = vmul.f32 %v713, %v753
        %v758 = vrot.slane %v754, 1
        %v759 = vrot.slane %v755, 1
        %v760 = vsel %vm389, %v758, %v759
        %v762 = vadd.f32 %v725, %v760
        %s763 = sld [smem:[#allocation9 + $0x78]]
        %v764 = vstv %s763
        %v765 = vmul.f32 %v712, %v764
        %v766 = vmul.f32 %v713, %v764
        %v769 = vrot.slane %v765, 1
        %v770 = vrot.slane %v766, 1
        %v771 = vsel %vm389, %v769, %v770
        %v773 = vadd.f32 %v729, %v771
        %s774 = sld [smem:[#allocation9 + $0xf]]
        %v775 = vstv %s774
        %v776 = vmul.f32 %v712, %v775
        %v777 = vmul.f32 %v713, %v775
        %v780 = vrot.slane %v776, 2
        %v781 = vrot.slane %v777, 2
        %v782 = vsel %vm434, %v780, %v781
        %v784 = vadd.f32 %v740, %v782
        %s785 = sld [smem:[#allocation9 + $0x33]]
        %v786 = vstv %s785
        %v787 = vmul.f32 %v712, %v786
        %v788 = vmul.f32 %v713, %v786
        %v791 = vrot.slane %v787, 2
        %v792 = vrot.slane %v788, 2
        %v793 = vsel %vm434, %v791, %v792
        %v795 = vadd.f32 %v751, %v793
        %s796 = sld [smem:[#allocation9 + $0x57]]
        %v797 = vstv %s796
        %v798 = vmul.f32 %v712, %v797
        %v799 = vmul.f32 %v713, %v797
        %v802 = vrot.slane %v798, 2
        %v803 = vrot.slane %v799, 2
        %v804 = vsel %vm434, %v802, %v803
        %v806 = vadd.f32 %v762, %v804
        %s807 = sld [smem:[#allocation9 + $0x7b]]
        %v808 = vstv %s807
        %v809 = vmul.f32 %v712, %v808
        %v810 = vmul.f32 %v713, %v808
        %v813 = vrot.slane %v809, 2
        %v814 = vrot.slane %v810, 2
        %v815 = vsel %vm434, %v813, %v814
        %v817 = vadd.f32 %v773, %v815
        %s818 = sld [smem:[#allocation9 + $0xa]]
        %v819 = vstv %s818
        %v820 = vmul.f32 %v690, %v819
        %v821 = vadd.f32 %v784, %v820
        %s822 = sld [smem:[#allocation9 + $0x2e]]
        %v823 = vstv %s822
        %v824 = vmul.f32 %v690, %v823
        %v825 = vadd.f32 %v795, %v824
        %s826 = sld [smem:[#allocation9 + $0x52]]
        %v827 = vstv %s826
        %v828 = vmul.f32 %v690, %v827
        %v829 = vadd.f32 %v806, %v828
        %s830 = sld [smem:[#allocation9 + $0x76]]
        %v831 = vstv %s830
        %v832 = vmul.f32 %v690, %v831
        %v833 = vadd.f32 %v817, %v832
        %s834 = sld [smem:[#allocation9 + $0xd]]
        %v835 = vstv %s834
        %v836 = vmul.f32 %v690, %v835
        %v837 = vmul.f32 %v691, %v835
        %v840 = vrot.slane %v836, 1
        %v841 = vrot.slane %v837, 1
        %v842 = vsel %vm389, %v840, %v841
        %v844 = vadd.f32 %v821, %v842
        %s845 = sld [smem:[#allocation9 + $0x31]]
        %v846 = vstv %s845
        %v847 = vmul.f32 %v690, %v846
        %v848 = vmul.f32 %v691, %v846
        %v851 = vrot.slane %v847, 1
        %v852 = vrot.slane %v848, 1
        %v853 = vsel %vm389, %v851, %v852
        %v855 = vadd.f32 %v825, %v853
        %s856 = sld [smem:[#allocation9 + $0x55]]
        %v857 = vstv %s856
        %v858 = vmul.f32 %v690, %v857
        %v859 = vmul.f32 %v691, %v857
        %v862 = vrot.slane %v858, 1
        %v863 = vrot.slane %v859, 1
        %v864 = vsel %vm389, %v862, %v863
        %v866 = vadd.f32 %v829, %v864
        %s867 = sld [smem:[#allocation9 + $0x79]]
        %v868 = vstv %s867
        %v869 = vmul.f32 %v690, %v868
        %v870 = vmul.f32 %v691, %v868
        %v873 = vrot.slane %v869, 1
        %v874 = vrot.slane %v870, 1
        %v875 = vsel %vm389, %v873, %v874
        %v877 = vadd.f32 %v833, %v875
        %s878 = sld [smem:[#allocation9 + $0x10]]
        %v879 = vstv %s878
        %v880 = vmul.f32 %v690, %v879
        %v881 = vmul.f32 %v691, %v879
        %v884 = vrot.slane %v880, 2
        %v885 = vrot.slane %v881, 2
        %v886 = vsel %vm434, %v884, %v885
        %v888 = vadd.f32 %v844, %v886
        %s889 = sld [smem:[#allocation9 + $0x34]]
        %v890 = vstv %s889
        %v891 = vmul.f32 %v690, %v890
        %v892 = vmul.f32 %v691, %v890
        %v895 = vrot.slane %v891, 2
        %v896 = vrot.slane %v892, 2
        %v897 = vsel %vm434, %v895, %v896
        %v899 = vadd.f32 %v855, %v897
        %s900 = sld [smem:[#allocation9 + $0x58]]
        %v901 = vstv %s900
        %v902 = vmul.f32 %v690, %v901
        %v903 = vmul.f32 %v691, %v901
        %v906 = vrot.slane %v902, 2
        %v907 = vrot.slane %v903, 2
        %v908 = vsel %vm434, %v906, %v907
        %v910 = vadd.f32 %v866, %v908
        %s911 = sld [smem:[#allocation9 + $0x7c]]
        %v912 = vstv %s911
        %v913 = vmul.f32 %v690, %v912
        %v914 = vmul.f32 %v691, %v912
        %v917 = vrot.slane %v913, 2
        %v918 = vrot.slane %v914, 2
        %v919 = vsel %vm434, %v917, %v918
        %v921 = vadd.f32 %v877, %v919
        %922 = vrot.lane.b32.xlu0 %v702, 127
        %v923 = vpop.permute.xlu0 %922
        %924 = vrot.lane.b32.xlu0 %v703, 127
        %v925 = vpop.permute.xlu0 %924
        %v928 = vsel %vm333, %v923, 0.0
        %v929 = vsel %vm333, %v925, 0.0
        %s930 = sld [smem:[#allocation9 + $0xb]]
        %v931 = vstv %s930
        %v932 = vmul.f32 %v928, %v931
        %v933 = vadd.f32 %v888, %v932
        %s934 = sld [smem:[#allocation9 + $0x2f]]
        %v935 = vstv %s934
        %v936 = vmul.f32 %v928, %v935
        %v937 = vadd.f32 %v899, %v936
        %s938 = sld [smem:[#allocation9 + $0x53]]
        %v939 = vstv %s938
        %v940 = vmul.f32 %v928, %v939
        %v941 = vadd.f32 %v910, %v940
        %s942 = sld [smem:[#allocation9 + $0x77]]
        %v943 = vstv %s942
        %v944 = vmul.f32 %v928, %v943
        %v945 = vadd.f32 %v921, %v944
        %s946 = sld [smem:[#allocation9 + $0xe]]
        %v947 = vstv %s946
        %v948 = vmul.f32 %v928, %v947
        %v949 = vmul.f32 %v929, %v947
        %v952 = vrot.slane %v948, 1
        %v953 = vrot.slane %v949, 1
        %v954 = vsel %vm389, %v952, %v953
        %v956 = vadd.f32 %v933, %v954
        %s957 = sld [smem:[#allocation9 + $0x32]]
        %v958 = vstv %s957
        %v959 = vmul.f32 %v928, %v958
        %v960 = vmul.f32 %v929, %v958
        %v963 = vrot.slane %v959, 1
        %v964 = vrot.slane %v960, 1
        %v965 = vsel %vm389, %v963, %v964
        %v967 = vadd.f32 %v937, %v965
        %s968 = sld [smem:[#allocation9 + $0x56]]
        %v969 = vstv %s968
        %v970 = vmul.f32 %v928, %v969
        %v971 = vmul.f32 %v929, %v969
        %v974 = vrot.slane %v970, 1
        %v975 = vrot.slane %v971, 1
        %v976 = vsel %vm389, %v974, %v975
        %v978 = vadd.f32 %v941, %v976
        %s979 = sld [smem:[#allocation9 + $0x7a]]
        %v980 = vstv %s979
        %v981 = vmul.f32 %v928, %v980
        %v982 = vmul.f32 %v929, %v980
        %v985 = vrot.slane %v981, 1
        %v986 = vrot.slane %v982, 1
        %v987 = vsel %vm389, %v985, %v986
        %v989 = vadd.f32 %v945, %v987
        %s990 = sld [smem:[#allocation9 + $0x11]]
        %v991 = vstv %s990
        %v992 = vmul.f32 %v928, %v991
        %v993 = vmul.f32 %v929, %v991
        %v996 = vrot.slane %v992, 2
        %v997 = vrot.slane %v993, 2
        %v998 = vsel %vm434, %v996, %v997
        %v1000 = vadd.f32 %v956, %v998
        %s1001 = sld [smem:[#allocation9 + $0x35]]
        %v1002 = vstv %s1001
        %v1003 = vmul.f32 %v928, %v1002
        %v1004 = vmul.f32 %v929, %v1002
        %v1007 = vrot.slane %v1003, 2
        %v1008 = vrot.slane %v1004, 2
        %v1009 = vsel %vm434, %v1007, %v1008
        %v1011 = vadd.f32 %v967, %v1009
        %s1012 = sld [smem:[#allocation9 + $0x59]]
        %v1013 = vstv %s1012
        %v1014 = vmul.f32 %v928, %v1013
        %v1015 = vmul.f32 %v929, %v1013
        %v1018 = vrot.slane %v1014, 2
        %v1019 = vrot.slane %v1015, 2
        %v1020 = vsel %vm434, %v1018, %v1019
        %v1022 = vadd.f32 %v978, %v1020
        %s1023 = sld [smem:[#allocation9 + $0x7d]]
        %v1024 = vstv %s1023
        %v1025 = vmul.f32 %v928, %v1024
        %v1026 = vmul.f32 %v929, %v1024
        %v1029 = vrot.slane %v1025, 2
        %v1030 = vrot.slane %v1026, 2
        %v1031 = vsel %vm434, %v1029, %v1030
        %v1033 = vadd.f32 %v989, %v1031
        %s1034 = scalar_lea.vmem [#allocation2], 32
        %v1035 = vld [vmem:[%s1034] sm:$0xff]
        %v1036 = vld [vmem:[%s1034 + $0x8] sm:$0x3]
        %1037 = vrot.lane.b32.xlu0 %v1035, 16
        %v1038 = vpop.permute.xlu0 %1037
        %v1039 = vsel %vm344, %v1038, %v1035
        %1040 = vrot.lane.b32.xlu0 %v1036, 16
        %v1041 = vpop.permute.xlu0 %1040
        %v1042 = vsel %vm344, %v1041, %v1036
        %1043 = vrot.lane.b32.xlu0 %v1039, 16
        %v1044 = vpop.permute.xlu0 %1043
        %1045 = vrot.lane.b32.xlu0 %v1042, 16
        %v1046 = vpop.permute.xlu0 %1045
        %v1047 = vsel %vm344, %v1044, %v1035
        %v1048 = vsel %vm344, %v1046, %v1036
        %1051 = vrot.lane.b32.xlu0 %v1047, 113
        %v1052 = vpop.permute.xlu0 %1051
        %1053 = vrot.lane.b32.xlu0 %v1048, 113
        %v1054 = vpop.permute.xlu0 %1053
        %v1057 = vsel %vm332, %v1052, 0.0
        %v1058 = vsel %vm332, %v1054, 0.0
        %s1059 = sld [smem:[#allocation9 + $0x12]]
        %v1060 = vstv %s1059
        %v1061 = vmul.f32 %v1057, %v1060
        %v1062 = vadd.f32 %v1000, %v1061
        %s1063 = sld [smem:[#allocation9 + $0x36]]
        %v1064 = vstv %s1063
        %v1065 = vmul.f32 %v1057, %v1064
        %v1066 = vadd.f32 %v1011, %v1065
        %s1067 = sld [smem:[#allocation9 + $0x5a]]
        %v1068 = vstv %s1067
        %v1069 = vmul.f32 %v1057, %v1068
        %v1070 = vadd.f32 %v1022, %v1069
        %s1071 = sld [smem:[#allocation9 + $0x7e]]
        %v1072 = vstv %s1071
        %v1073 = vmul.f32 %v1057, %v1072
        %v1074 = vadd.f32 %v1033, %v1073
        %s1075 = sld [smem:[#allocation9 + $0x15]]
        %v1076 = vstv %s1075
        %v1077 = vmul.f32 %v1057, %v1076
        %v1078 = vmul.f32 %v1058, %v1076
        %v1081 = vrot.slane %v1077, 1
        %v1082 = vrot.slane %v1078, 1
        %v1083 = vsel %vm389, %v1081, %v1082
        %v1085 = vadd.f32 %v1062, %v1083
        %s1086 = sld [smem:[#allocation9 + $0x39]]
        %v1087 = vstv %s1086
        %v1088 = vmul.f32 %v1057, %v1087
        %v1089 = vmul.f32 %v1058, %v1087
        %v1092 = vrot.slane %v1088, 1
        %v1093 = vrot.slane %v1089, 1
        %v1094 = vsel %vm389, %v1092, %v1093
        %v1096 = vadd.f32 %v1066, %v1094
        %s1097 = sld [smem:[#allocation9 + $0x5d]]
        %v1098 = vstv %s1097
        %v1099 = vmul.f32 %v1057, %v1098
        %v1100 = vmul.f32 %v1058, %v1098
        %v1103 = vrot.slane %v1099, 1
        %v1104 = vrot.slane %v1100, 1
        %v1105 = vsel %vm389, %v1103, %v1104
        %v1107 = vadd.f32 %v1070, %v1105
        %s1108 = sld [smem:[#allocation9 + $0x81]]
        %v1109 = vstv %s1108
        %v1110 = vmul.f32 %v1057, %v1109
        %v1111 = vmul.f32 %v1058, %v1109
        %v1114 = vrot.slane %v1110, 1
        %v1115 = vrot.slane %v1111, 1
        %v1116 = vsel %vm389, %v1114, %v1115
        %v1118 = vadd.f32 %v1074, %v1116
        %s1119 = sld [smem:[#allocation9 + $0x18]]
        %v1120 = vstv %s1119
        %v1121 = vmul.f32 %v1057, %v1120
        %v1122 = vmul.f32 %v1058, %v1120
        %v1125 = vrot.slane %v1121, 2
        %v1126 = vrot.slane %v1122, 2
        %v1127 = vsel %vm434, %v1125, %v1126
        %v1129 = vadd.f32 %v1085, %v1127
        %s1130 = sld [smem:[#allocation9 + $0x3c]]
        %v1131 = vstv %s1130
        %v1132 = vmul.f32 %v1057, %v1131
        %v1133 = vmul.f32 %v1058, %v1131
        %v1136 = vrot.slane %v1132, 2
        %v1137 = vrot.slane %v1133, 2
        %v1138 = vsel %vm434, %v1136, %v1137
        %v1140 = vadd.f32 %v1096, %v1138
        %s1141 = sld [smem:[#allocation9 + $0x60]]
        %v1142 = vstv %s1141
        %v1143 = vmul.f32 %v1057, %v1142
        %v1144 = vmul.f32 %v1058, %v1142
        %v1147 = vrot.slane %v1143, 2
        %v1148 = vrot.slane %v1144, 2
        %v1149 = vsel %vm434, %v1147, %v1148
        %v1151 = vadd.f32 %v1107, %v1149
        %s1152 = sld [smem:[#allocation9 + $0x84]]
        %v1153 = vstv %s1152
        %v1154 = vmul.f32 %v1057, %v1153
        %v1155 = vmul.f32 %v1058, %v1153
        %v1158 = vrot.slane %v1154, 2
        %v1159 = vrot.slane %v1155, 2
        %v1160 = vsel %vm434, %v1158, %v1159
        %v1162 = vadd.f32 %v1118, %v1160
        %s1163 = sld [smem:[#allocation9 + $0x13]]
        %v1164 = vstv %s1163
        %v1165 = vmul.f32 %v1035, %v1164
        %v1166 = vadd.f32 %v1129, %v1165
        %s1167 = sld [smem:[#allocation9 + $0x37]]
        %v1168 = vstv %s1167
        %v1169 = vmul.f32 %v1035, %v1168
        %v1170 = vadd.f32 %v1140, %v1169
        %s1171 = sld [smem:[#allocation9 + $0x5b]]
        %v1172 = vstv %s1171
        %v1173 = vmul.f32 %v1035, %v1172
        %v1174 = vadd.f32 %v1151, %v1173
        %s1175 = sld [smem:[#allocation9 + $0x7f]]
        %v1176 = vstv %s1175
        %v1177 = vmul.f32 %v1035, %v1176
        %v1178 = vadd.f32 %v1162, %v1177
        %s1179 = sld [smem:[#allocation9 + $0x16]]
        %v1180 = vstv %s1179
        %v1181 = vmul.f32 %v1035, %v1180
        %v1182 = vmul.f32 %v1036, %v1180
        %v1185 = vrot.slane %v1181, 1
        %v1186 = vrot.slane %v1182, 1
        %v1187 = vsel %vm389, %v1185, %v1186
        %v1189 = vadd.f32 %v1166, %v1187
        %s1190 = sld [smem:[#allocation9 + $0x3a]]
        %v1191 = vstv %s1190
        %v1192 = vmul.f32 %v1035, %v1191
        %v1193 = vmul.f32 %v1036, %v1191
        %v1196 = vrot.slane %v1192, 1
        %v1197 = vrot.slane %v1193, 1
        %v1198 = vsel %vm389, %v1196, %v1197
        %v1200 = vadd.f32 %v1170, %v1198
        %s1201 = sld [smem:[#allocation9 + $0x5e]]
        %v1202 = vstv %s1201
        %v1203 = vmul.f32 %v1035, %v1202
        %v1204 = vmul.f32 %v1036, %v1202
        %v1207 = vrot.slane %v1203, 1
        %v1208 = vrot.slane %v1204, 1
        %v1209 = vsel %vm389, %v1207, %v1208
        %v1211 = vadd.f32 %v1174, %v1209
        %s1212 = sld [smem:[#allocation9 + $0x82]]
        %v1213 = vstv %s1212
        %v1214 = vmul.f32 %v1035, %v1213
        %v1215 = vmul.f32 %v1036, %v1213
        %v1218 = vrot.slane %v1214, 1
        %v1219 = vrot.slane %v1215, 1
        %v1220 = vsel %vm389, %v1218, %v1219
        %v1222 = vadd.f32 %v1178, %v1220
        %s1223 = sld [smem:[#allocation9 + $0x19]]
        %v1224 = vstv %s1223
        %v1225 = vmul.f32 %v1035, %v1224
        %v1226 = vmul.f32 %v1036, %v1224
        %v1229 = vrot.slane %v1225, 2
        %v1230 = vrot.slane %v1226, 2
        %v1231 = vsel %vm434, %v1229, %v1230
        %v1233 = vadd.f32 %v1189, %v1231
        %s1234 = sld [smem:[#allocation9 + $0x3d]]
        %v1235 = vstv %s1234
        %v1236 = vmul.f32 %v1035, %v1235
        %v1237 = vmul.f32 %v1036, %v1235
        %v1240 = vrot.slane %v1236, 2
        %v1241 = vrot.slane %v1237, 2
        %v1242 = vsel %vm434, %v1240, %v1241
        %v1244 = vadd.f32 %v1200, %v1242
        %s1245 = sld [smem:[#allocation9 + $0x61]]
        %v1246 = vstv %s1245
        %v1247 = vmul.f32 %v1035, %v1246
        %v1248 = vmul.f32 %v1036, %v1246
        %v1251 = vrot.slane %v1247, 2
        %v1252 = vrot.slane %v1248, 2
        %v1253 = vsel %vm434, %v1251, %v1252
        %v1255 = vadd.f32 %v1211, %v1253
        %s1256 = sld [smem:[#allocation9 + $0x85]]
        %v1257 = vstv %s1256
        %v1258 = vmul.f32 %v1035, %v1257
        %v1259 = vmul.f32 %v1036, %v1257
        %v1262 = vrot.slane %v1258, 2
        %v1263 = vrot.slane %v1259, 2
        %v1264 = vsel %vm434, %v1262, %v1263
        %v1266 = vadd.f32 %v1222, %v1264
        %1267 = vrot.lane.b32.xlu0 %v1047, 127
        %v1268 = vpop.permute.xlu0 %1267
        %1269 = vrot.lane.b32.xlu0 %v1048, 127
        %v1270 = vpop.permute.xlu0 %1269
        %v1273 = vsel %vm333, %v1268, 0.0
        %v1274 = vsel %vm333, %v1270, 0.0
        %s1275 = sld [smem:[#allocation9 + $0x14]]
        %v1276 = vstv %s1275
        %v1277 = vmul.f32 %v1273, %v1276
        %v1278 = vadd.f32 %v1233, %v1277
        %s1279 = sld [smem:[#allocation9 + $0x38]]
        %v1280 = vstv %s1279
        %v1281 = vmul.f32 %v1273, %v1280
        %v1282 = vadd.f32 %v1244, %v1281
        %s1283 = sld [smem:[#allocation9 + $0x5c]]
        %v1284 = vstv %s1283
        %v1285 = vmul.f32 %v1273, %v1284
        %v1286 = vadd.f32 %v1255, %v1285
        %s1287 = sld [smem:[#allocation9 + $0x80]]
        %v1288 = vstv %s1287
        %v1289 = vmul.f32 %v1273, %v1288
        %v1290 = vadd.f32 %v1266, %v1289
        %s1291 = sld [smem:[#allocation9 + $0x17]]
        %v1292 = vstv %s1291
        %v1293 = vmul.f32 %v1273, %v1292
        %v1294 = vmul.f32 %v1274, %v1292
        %v1297 = vrot.slane %v1293, 1
        %v1298 = vrot.slane %v1294, 1
        %v1299 = vsel %vm389, %v1297, %v1298
        %v1301 = vadd.f32 %v1278, %v1299
        %s1302 = sld [smem:[#allocation9 + $0x3b]]
        %v1303 = vstv %s1302
        %v1304 = vmul.f32 %v1273, %v1303
        %v1305 = vmul.f32 %v1274, %v1303
        %v1308 = vrot.slane %v1304, 1
        %v1309 = vrot.slane %v1305, 1
        %v1310 = vsel %vm389, %v1308, %v1309
        %v1312 = vadd.f32 %v1282, %v1310
        %s1313 = sld [smem:[#allocation9 + $0x5f]]
        %v1314 = vstv %s1313
        %v1315 = vmul.f32 %v1273, %v1314
        %v1316 = vmul.f32 %v1274, %v1314
        %v1319 = vrot.slane %v1315, 1
        %v1320 = vrot.slane %v1316, 1
        %v1321 = vsel %vm389, %v1319, %v1320
        %v1323 = vadd.f32 %v1286, %v1321
        %s1324 = sld [smem:[#allocation9 + $0x83]]
        %v1325 = vstv %s1324
        %v1326 = vmul.f32 %v1273, %v1325
        %v1327 = vmul.f32 %v1274, %v1325
        %v1330 = vrot.slane %v1326, 1
        %v1331 = vrot.slane %v1327, 1
        %v1332 = vsel %vm389, %v1330, %v1331
        %v1334 = vadd.f32 %v1290, %v1332
        %s1335 = sld [smem:[#allocation9 + $0x1a]]
        %v1336 = vstv %s1335
        %v1337 = vmul.f32 %v1273, %v1336
        %v1338 = vmul.f32 %v1274, %v1336
        %v1341 = vrot.slane %v1337, 2
        %v1342 = vrot.slane %v1338, 2
        %v1343 = vsel %vm434, %v1341, %v1342
        %v1345 = vadd.f32 %v1301, %v1343
        %s1346 = sld [smem:[#allocation9 + $0x3e]]
        %v1347 = vstv %s1346
        %v1348 = vmul.f32 %v1273, %v1347
        %v1349 = vmul.f32 %v1274, %v1347
        %v1352 = vrot.slane %v1348, 2
        %v1353 = vrot.slane %v1349, 2
        %v1354 = vsel %vm434, %v1352, %v1353
        %v1356 = vadd.f32 %v1312, %v1354
        %s1357 = sld [smem:[#allocation9 + $0x62]]
        %v1358 = vstv %s1357
        %v1359 = vmul.f32 %v1273, %v1358
        %v1360 = vmul.f32 %v1274, %v1358
        %v1363 = vrot.slane %v1359, 2
        %v1364 = vrot.slane %v1360, 2
        %v1365 = vsel %vm434, %v1363, %v1364
        %v1367 = vadd.f32 %v1323, %v1365
        %s1368 = sld [smem:[#allocation9 + $0x86]]
        %v1369 = vstv %s1368
        %v1370 = vmul.f32 %v1273, %v1369
        %v1371 = vmul.f32 %v1274, %v1369
        %v1374 = vrot.slane %v1370, 2
        %v1375 = vrot.slane %v1371, 2
        %v1376 = vsel %vm434, %v1374, %v1375
        %v1378 = vadd.f32 %v1334, %v1376
        %s1379 = scalar_lea.vmem [#allocation2], 48
        %v1380 = vld [vmem:[%s1379] sm:$0xff]
        %v1381 = vld [vmem:[%s1379 + $0x8] sm:$0x3]
        %1382 = vrot.lane.b32.xlu0 %v1380, 16
        %v1383 = vpop.permute.xlu0 %1382
        %v1384 = vsel %vm344, %v1383, %v1380
        %1385 = vrot.lane.b32.xlu0 %v1381, 16
        %v1386 = vpop.permute.xlu0 %1385
        %v1387 = vsel %vm344, %v1386, %v1381
        %1388 = vrot.lane.b32.xlu0 %v1384, 16
        %v1389 = vpop.permute.xlu0 %1388
        %1390 = vrot.lane.b32.xlu0 %v1387, 16
        %v1391 = vpop.permute.xlu0 %1390
        %v1392 = vsel %vm344, %v1389, %v1380
        %v1393 = vsel %vm344, %v1391, %v1381
        %1396 = vrot.lane.b32.xlu0 %v1392, 113
        %v1397 = vpop.permute.xlu0 %1396
        %1398 = vrot.lane.b32.xlu0 %v1393, 113
        %v1399 = vpop.permute.xlu0 %1398
        %v1402 = vsel %vm332, %v1397, 0.0
        %v1403 = vsel %vm332, %v1399, 0.0
        %s1404 = sld [smem:[#allocation9 + $0x1b]]
        %v1405 = vstv %s1404
        %v1406 = vmul.f32 %v1402, %v1405
        %v1407 = vadd.f32 %v1345, %v1406
        %s1408 = sld [smem:[#allocation9 + $0x3f]]
        %v1409 = vstv %s1408
        %v1410 = vmul.f32 %v1402, %v1409
        %v1411 = vadd.f32 %v1356, %v1410
        %s1412 = sld [smem:[#allocation9 + $0x63]]
        %v1413 = vstv %s1412
        %v1414 = vmul.f32 %v1402, %v1413
        %v1415 = vadd.f32 %v1367, %v1414
        %s1416 = sld [smem:[#allocation9 + $0x87]]
        %v1417 = vstv %s1416
        %v1418 = vmul.f32 %v1402, %v1417
        %v1419 = vadd.f32 %v1378, %v1418
        %s1420 = sld [smem:[#allocation9 + $0x1e]]
        %v1421 = vstv %s1420
        %v1422 = vmul.f32 %v1402, %v1421
        %v1423 = vmul.f32 %v1403, %v1421
        %v1426 = vrot.slane %v1422, 1
        %v1427 = vrot.slane %v1423, 1
        %v1428 = vsel %vm389, %v1426, %v1427
        %v1430 = vadd.f32 %v1407, %v1428
        %s1431 = sld [smem:[#allocation9 + $0x42]]
        %v1432 = vstv %s1431
        %v1433 = vmul.f32 %v1402, %v1432
        %v1434 = vmul.f32 %v1403, %v1432
        %v1437 = vrot.slane %v1433, 1
        %v1438 = vrot.slane %v1434, 1
        %v1439 = vsel %vm389, %v1437, %v1438
        %v1441 = vadd.f32 %v1411, %v1439
        %s1442 = sld [smem:[#allocation9 + $0x66]]
        %v1443 = vstv %s1442
        %v1444 = vmul.f32 %v1402, %v1443
        %v1445 = vmul.f32 %v1403, %v1443
        %v1448 = vrot.slane %v1444, 1
        %v1449 = vrot.slane %v1445, 1
        %v1450 = vsel %vm389, %v1448, %v1449
        %v1452 = vadd.f32 %v1415, %v1450
        %s1453 = sld [smem:[#allocation9 + $0x8a]]
        %v1454 = vstv %s1453
        %v1455 = vmul.f32 %v1402, %v1454
        %v1456 = vmul.f32 %v1403, %v1454
        %v1459 = vrot.slane %v1455, 1
        %v1460 = vrot.slane %v1456, 1
        %v1461 = vsel %vm389, %v1459, %v1460
        %v1463 = vadd.f32 %v1419, %v1461
        %s1464 = sld [smem:[#allocation9 + $0x21]]
        %v1465 = vstv %s1464
        %v1466 = vmul.f32 %v1402, %v1465
        %v1467 = vmul.f32 %v1403, %v1465
        %v1470 = vrot.slane %v1466, 2
        %v1471 = vrot.slane %v1467, 2
        %v1472 = vsel %vm434, %v1470, %v1471
        %v1474 = vadd.f32 %v1430, %v1472
        %s1475 = sld [smem:[#allocation9 + $0x45]]
        %v1476 = vstv %s1475
        %v1477 = vmul.f32 %v1402, %v1476
        %v1478 = vmul.f32 %v1403, %v1476
        %v1481 = vrot.slane %v1477, 2
        %v1482 = vrot.slane %v1478, 2
        %v1483 = vsel %vm434, %v1481, %v1482
        %v1485 = vadd.f32 %v1441, %v1483
        %s1486 = sld [smem:[#allocation9 + $0x69]]
        %v1487 = vstv %s1486
        %v1488 = vmul.f32 %v1402, %v1487
        %v1489 = vmul.f32 %v1403, %v1487
        %v1492 = vrot.slane %v1488, 2
        %v1493 = vrot.slane %v1489, 2
        %v1494 = vsel %vm434, %v1492, %v1493
        %v1496 = vadd.f32 %v1452, %v1494
        %s1497 = sld [smem:[#allocation9 + $0x8d]]
        %v1498 = vstv %s1497
        %v1499 = vmul.f32 %v1402, %v1498
        %v1500 = vmul.f32 %v1403, %v1498
        %v1503 = vrot.slane %v1499, 2
        %v1504 = vrot.slane %v1500, 2
        %v1505 = vsel %vm434, %v1503, %v1504
        %v1507 = vadd.f32 %v1463, %v1505
        %s1508 = sld [smem:[#allocation9 + $0x1c]]
        %v1509 = vstv %s1508
        %v1510 = vmul.f32 %v1380, %v1509
        %v1511 = vadd.f32 %v1474, %v1510
        %s1512 = sld [smem:[#allocation9 + $0x40]]
        %v1513 = vstv %s1512
        %v1514 = vmul.f32 %v1380, %v1513
        %v1515 = vadd.f32 %v1485, %v1514
        %s1516 = sld [smem:[#allocation9 + $0x64]]
        %v1517 = vstv %s1516
        %v1518 = vmul.f32 %v1380, %v1517
        %v1519 = vadd.f32 %v1496, %v1518
        %s1520 = sld [smem:[#allocation9 + $0x88]]
        %v1521 = vstv %s1520
        %v1522 = vmul.f32 %v1380, %v1521
        %v1523 = vadd.f32 %v1507, %v1522
        %s1524 = sld [smem:[#allocation9 + $0x1f]]
        %v1525 = vstv %s1524
        %v1526 = vmul.f32 %v1380, %v1525
        %v1527 = vmul.f32 %v1381, %v1525
        %v1530 = vrot.slane %v1526, 1
        %v1531 = vrot.slane %v1527, 1
        %v1532 = vsel %vm389, %v1530, %v1531
        %v1534 = vadd.f32 %v1511, %v1532
        %s1535 = sld [smem:[#allocation9 + $0x43]]
        %v1536 = vstv %s1535
        %v1537 = vmul.f32 %v1380, %v1536
        %v1538 = vmul.f32 %v1381, %v1536
        %v1541 = vrot.slane %v1537, 1
        %v1542 = vrot.slane %v1538, 1
        %v1543 = vsel %vm389, %v1541, %v1542
        %v1545 = vadd.f32 %v1515, %v1543
        %s1546 = sld [smem:[#allocation9 + $0x67]]
        %v1547 = vstv %s1546
        %v1548 = vmul.f32 %v1380, %v1547
        %v1549 = vmul.f32 %v1381, %v1547
        %v1552 = vrot.slane %v1548, 1
        %v1553 = vrot.slane %v1549, 1
        %v1554 = vsel %vm389, %v1552, %v1553
        %v1556 = vadd.f32 %v1519, %v1554
        %s1557 = sld [smem:[#allocation9 + $0x8b]]
        %v1558 = vstv %s1557
        %v1559 = vmul.f32 %v1380, %v1558
        %v1560 = vmul.f32 %v1381, %v1558
        %v1563 = vrot.slane %v1559, 1
        %v1564 = vrot.slane %v1560, 1
        %v1565 = vsel %vm389, %v1563, %v1564
        %v1567 = vadd.f32 %v1523, %v1565
        %s1568 = sld [smem:[#allocation9 + $0x22]]
        %v1569 = vstv %s1568
        %v1570 = vmul.f32 %v1380, %v1569
        %v1571 = vmul.f32 %v1381, %v1569
        %v1574 = vrot.slane %v1570, 2
        %v1575 = vrot.slane %v1571, 2
        %v1576 = vsel %vm434, %v1574, %v1575
        %v1578 = vadd.f32 %v1534, %v1576
        %s1579 = sld [smem:[#allocation9 + $0x46]]
        %v1580 = vstv %s1579
        %v1581 = vmul.f32 %v1380, %v1580
        %v1582 = vmul.f32 %v1381, %v1580
        %v1585 = vrot.slane %v1581, 2
        %v1586 = vrot.slane %v1582, 2
        %v1587 = vsel %vm434, %v1585, %v1586
        %v1589 = vadd.f32 %v1545, %v1587
        %s1590 = sld [smem:[#allocation9 + $0x6a]]
        %v1591 = vstv %s1590
        %v1592 = vmul.f32 %v1380, %v1591
        %v1593 = vmul.f32 %v1381, %v1591
        %v1596 = vrot.slane %v1592, 2
        %v1597 = vrot.slane %v1593, 2
        %v1598 = vsel %vm434, %v1596, %v1597
        %v1600 = vadd.f32 %v1556, %v1598
        %s1601 = sld [smem:[#allocation9 + $0x8e]]
        %v1602 = vstv %s1601
        %v1603 = vmul.f32 %v1380, %v1602
        %v1604 = vmul.f32 %v1381, %v1602
        %v1607 = vrot.slane %v1603, 2
        %v1608 = vrot.slane %v1604, 2
        %v1609 = vsel %vm434, %v1607, %v1608
        %v1611 = vadd.f32 %v1567, %v1609
        %1612 = vrot.lane.b32.xlu0 %v1392, 127
        %v1613 = vpop.permute.xlu0 %1612
        %1614 = vrot.lane.b32.xlu0 %v1393, 127
        %v1615 = vpop.permute.xlu0 %1614
        %v1618 = vsel %vm333, %v1613, 0.0
        %v1619 = vsel %vm333, %v1615, 0.0
        %s1620 = sld [smem:[#allocation9 + $0x1d]]
        %v1621 = vstv %s1620
        %v1622 = vmul.f32 %v1618, %v1621
        %v1623 = vadd.f32 %v1578, %v1622
        %s1624 = sld [smem:[#allocation9 + $0x41]]
        %v1625 = vstv %s1624
        %v1626 = vmul.f32 %v1618, %v1625
        %v1627 = vadd.f32 %v1589, %v1626
        %s1628 = sld [smem:[#allocation9 + $0x65]]
        %v1629 = vstv %s1628
        %v1630 = vmul.f32 %v1618, %v1629
        %v1631 = vadd.f32 %v1600, %v1630
        %s1632 = sld [smem:[#allocation9 + $0x89]]
        %v1633 = vstv %s1632
        %v1634 = vmul.f32 %v1618, %v1633
        %v1635 = vadd.f32 %v1611, %v1634
        %s1636 = sld [smem:[#allocation9 + $0x20]]
        %v1637 = vstv %s1636
        %v1638 = vmul.f32 %v1618, %v1637
        %v1639 = vmul.f32 %v1619, %v1637
        %v1642 = vrot.slane %v1638, 1
        %v1643 = vrot.slane %v1639, 1
        %v1644 = vsel %vm389, %v1642, %v1643
        %v1646 = vadd.f32 %v1623, %v1644
        %s1647 = sld [smem:[#allocation9 + $0x44]]
        %v1648 = vstv %s1647
        %v1649 = vmul.f32 %v1618, %v1648
        %v1650 = vmul.f32 %v1619, %v1648
        %v1653 = vrot.slane %v1649, 1
        %v1654 = vrot.slane %v1650, 1
        %v1655 = vsel %vm389, %v1653, %v1654
        %v1657 = vadd.f32 %v1627, %v1655
        %s1658 = sld [smem:[#allocation9 + $0x68]]
        %v1659 = vstv %s1658
        %v1660 = vmul.f32 %v1618, %v1659
        %v1661 = vmul.f32 %v1619, %v1659
        %v1664 = vrot.slane %v1660, 1
        %v1665 = vrot.slane %v1661, 1
        %v1666 = vsel %vm389, %v1664, %v1665
        %v1668 = vadd.f32 %v1631, %v1666
        %s1669 = sld [smem:[#allocation9 + $0x8c]]
        %v1670 = vstv %s1669
        %v1671 = vmul.f32 %v1618, %v1670
        %v1672 = vmul.f32 %v1619, %v1670
        %v1675 = vrot.slane %v1671, 1
        %v1676 = vrot.slane %v1672, 1
        %v1677 = vsel %vm389, %v1675, %v1676
        %v1679 = vadd.f32 %v1635, %v1677
        %s1680 = sld [smem:[#allocation9 + $0x23]]
        %v1681 = vstv %s1680
        %v1682 = vmul.f32 %v1618, %v1681
        %v1683 = vmul.f32 %v1619, %v1681
        %v1686 = vrot.slane %v1682, 2
        %v1687 = vrot.slane %v1683, 2
        %v1688 = vsel %vm434, %v1686, %v1687
        %v1690 = vadd.f32 %v1646, %v1688
        %s1691 = sld [smem:[#allocation9 + $0x47]]
        %v1692 = vstv %s1691
        %v1693 = vmul.f32 %v1618, %v1692
        %v1694 = vmul.f32 %v1619, %v1692
        %v1697 = vrot.slane %v1693, 2
        %v1698 = vrot.slane %v1694, 2
        %v1699 = vsel %vm434, %v1697, %v1698
        %v1701 = vadd.f32 %v1657, %v1699
        %s1702 = sld [smem:[#allocation9 + $0x6b]]
        %v1703 = vstv %s1702
        %v1704 = vmul.f32 %v1618, %v1703
        %v1705 = vmul.f32 %v1619, %v1703
        %v1708 = vrot.slane %v1704, 2
        %v1709 = vrot.slane %v1705, 2
        %v1710 = vsel %vm434, %v1708, %v1709
        %v1712 = vadd.f32 %v1668, %v1710
        %s1713 = sld [smem:[#allocation9 + $0x8f]]
        %v1714 = vstv %s1713
        %v1715 = vmul.f32 %v1618, %v1714
        %v1716 = vmul.f32 %v1619, %v1714
        %v1719 = vrot.slane %v1715, 2
        %v1720 = vrot.slane %v1716, 2
        %v1721 = vsel %vm434, %v1719, %v1720
        %v1723 = vadd.f32 %v1679, %v1721
        %1724 = vst.msk [vmem:[%s303] sm:$0xff] %vm308, %v1690
        %s1725 = scalar_lea.vmem %s303, 8 [#allocation12]
        %1726 = vst.msk [vmem:[%s1725] sm:$0xff] %vm308, %v1701
        %s1727 = scalar_lea.vmem %s303, 16 [#allocation12]
        %1728 = vst.msk [vmem:[%s1727] sm:$0xff] %vm308, %v1712
        %s1729 = scalar_lea.vmem %s303, 24 [#allocation12]
        %1730 = vst.msk [vmem:[%s1729] sm:$0xff] %vm308, %v1723
        %s1731 = sand.u32 %s146, 1
        %s1732 = scalar_lea.sflag [#allocation5], %s1731
        %s1733 = sand.u32 %s146, 1
        %s1734 = smul.addr %s1733, 32
        %s1735 = scalar_lea.vmem [#allocation12], %s1734
        // Predicated region
        $region53: #{tpu_custom_call.1} parent=35 // pred_check
          %p1736 = pneg %p156
        $region54: #{tpu_custom_call.1} parent=35 // pred_check_branch
          %1738 = sbr.rel (%p1736) target = $region56
        $region55: #{tpu_custom_call.1} parent=35 // pred_region
          %s1740 = ssub.s32 512, 512
          %1741 = vsyncadd %s1732, %s1740
          %s1742 = smul.addr %s30, 8
          %s1743 = sadd.s32 %s31, %s1742
          %s1744 = smul.addr %s1743, 128
          %s1745 = scalar_lea.hbm %s4, %s1744
          %s1746 = sshll.u32 %s1735, 4
          %s1747 = int_to_ptr.vmem [resolvable:$true] %s1746
          %1752 = dma.vmem_to_hbm [thread:$0]  %s1747, 512, %s1745, %s1732, 128, 256, 8
        $region56: #{tpu_custom_call.1} parent=35 // pred_fallthru
          _
      $region36: #{tpu_custom_call.1} parent=5 // pred_fallthru
        _
      %p1753 = scmp.le.s32.totalorder 2, %s21
      // Predicated region
      $region57: #{tpu_custom_call.1} parent=5 // pred_check
        %p1754 = pneg %p1753
      $region58: #{tpu_custom_call.1} parent=5 // pred_check_branch
        %1756 = sbr.rel (%p1754) target = $region60
      $region59: #{tpu_custom_call.1} parent=5 // pred_region
        %s1757 = ssub.s32 %s21, 2
        // Predicated region
        $region61: #{tpu_custom_call.1} parent=59 // pred_check
          %p1758 = pneg %p162
        $region62: #{tpu_custom_call.1} parent=59 // pred_check_branch
          %1760 = sbr.rel (%p1758) target = $region64
        $region63: #{tpu_custom_call.1} parent=59 // pred_region
          %s1761 = sand.u32 %s147, 1
          %s1762 = scalar_lea.sflag [#allocation5], %s1761
          %s1763 = sand.u32 %s147, 1
          %s1764 = smul.addr %s1763, 32
          %s1765 = scalar_lea.vmem [#allocation12], %s1764
          %1766 = dma.done %s1762, 512
        $region64: #{tpu_custom_call.1} parent=59 // pred_fallthru
          _
      $region60: #{tpu_custom_call.1} parent=5 // pred_fallthru
        _
    $region6: #{tpu_custom_call.1} parent=1 // loop_footer
      %s25 = sadd.s32 1, %s21
    $region7: #{tpu_custom_call.1} parent=1 // loop_footer_branch
      %20 = sbr.rel target = $region3
    $region8: #{tpu_custom_call.1} parent=1 // loop_exit
      _
    %1767 = vsyncpa [#allocation4], 1
    %s1768 = scalar_lea.sflag [#allocation4], 1
    %1769 = vsyncpa %s1768, 1
    %1770 = vsyncpa [#allocation8], 1
    %s1771 = scalar_lea.sflag [#allocation8], 1
    %1772 = vsyncpa %s1771, 1
    %1773 = vsyncpa [#allocation5], 1
    %s1774 = scalar_lea.sflag [#allocation5], 1
    %1775 = vsyncpa %s1774, 1
    %1776 = vsyncpa [#allocation6], 1
    %s1777 = scalar_lea.sflag [#allocation6], 1
    %1778 = vsyncpa %s1777, 1
    %1779 = vsyncpa [#allocation11], 1

</llo_original>
